<compile_context>
chip_gen: v7x
topology: tpu7x:2x2x1
jax: 0.10.0
libtpu: 0.0.40
codegen_flags: <defaults>
</compile_context>

<pallas_src>
import numpy as np
import jax
import jax.numpy as jnp
from jax import lax
from jax.experimental import pallas as pl
from jax.experimental.pallas import tpu as pltpu


def _lstm_kernel(x_ref, wih_ref, whh_ref, bias_ref, wfc_ref, bfc_ref, out_ref):
    # x_ref   : (S, BT, 1)    time-major input for this batch tile
    # wih_ref : (1, 4*HP)     W_ih^T, gate order [i,f,o,g]; i/f/o columns pre-scaled 0.5
    # whh_ref : (HP, 4*HP)    W_hh^T, same gate layout / scaling
    # bias_ref: (1, 4*HP)     b_ih + b_hh, same layout / scaling (0 in padded lanes)
    # wfc_ref : (1, HP)       fc.weight (0 in padded lanes)
    # bfc_ref : (1, 1) SMEM   fc.bias
    # out_ref : (BT, 1)
    S, BT, _ = x_ref.shape
    HP = whh_ref.shape[0]

    def step(t, carry):
        h, c = carry                                              # (BT, HP) each
        # Per-step input projection (outer product) + recurrence matmul. The LSTM bias
        # and the 0.5 sigmoid pre-scale are already folded into wih/whh/bias columns.
        gates = (x_ref[t] * wih_ref[...] + bias_ref[...]
                 + jnp.dot(h, whh_ref[...],
                           preferred_element_type=jnp.float32))   # (BT, 4*HP)
        # Single tanh over the whole 4*HP slab (one EUP launch):
        #   i/f/o columns hold 0.5*a  -> sigmoid(a) = 0.5*tanh(0.5*a) + 0.5
        #   g column holds a          -> tanh(a)
        act = jnp.tanh(gates)
        ifo = 0.5 * act[:, :3 * HP] + 0.5
        i = ifo[:, 0 * HP:1 * HP]
        f = ifo[:, 1 * HP:2 * HP]
        o = ifo[:, 2 * HP:3 * HP]
        g = act[:, 3 * HP:]
        c_new = f * c + i * g
        h_new = o * jnp.tanh(c_new)
        return h_new, c_new

    h0 = jnp.zeros((BT, HP), jnp.float32)
    c0 = jnp.zeros((BT, HP), jnp.float32)
    # Small static S -> full unroll (cross-step overlap visible to the LLO scheduler);
    # long S -> modest partial unroll (serial chain saturates at small depth anyway).
    unroll = True if S <= 32 else 4
    h_last, _ = lax.fori_loop(0, S, step, (h0, c0), unroll=unroll)

    # Final linear layer (N=1): VPU multiply + XLU lane reduce, no MXU fill/drain.
    out_ref[...] = (jnp.sum(h_last * wfc_ref[...], axis=-1, keepdims=True)
                    + bfc_ref[0, 0])


def lstm_forward(x, params):
    """x: (B, S) float32 — matches torch forward(x) which does x.unsqueeze(-1)."""
    B, S = x.shape
    H = params["w_hh"].shape[1]
    HP = max(128, ((H + 127) // 128) * 128)      # per-gate lane padding
    BT = 8                                       # batch tile = 8 sublanes
    BP = ((B + BT - 1) // BT) * BT
    n_btiles = BP // BT

    perm = np.array([0, 1, 3, 2])                # torch [i,f,g,o] -> kernel [i,f,o,g]
    # Fold sigmoid's 0.5 pre-scale into the i/f/o weight/bias columns (exact in fp32).
    gate_scale = np.array([0.5, 0.5, 0.5, 1.0], np.float32)

    # --- glue: reshape / pad parameters to the kernel layout (plain JAX) ---
    w_ih = params["w_ih"].reshape(4, H)[perm] * gate_scale[:, None]        # (4, H)
    wih = jnp.pad(w_ih, ((0, 0), (0, HP - H))).reshape(1, 4 * HP)

    w_hh = params["w_hh"].reshape(4, H, H)[perm] * gate_scale[:, None, None]  # (gate,out,in)
    w_hh = jnp.pad(w_hh, ((0, 0), (0, HP - H), (0, HP - H)))               # (4, HP, HP)
    whh_t = jnp.transpose(w_hh, (2, 0, 1)).reshape(HP, 4 * HP)             # (in, gate*out)

    bias = (params["b_ih"] + params["b_hh"]).reshape(4, H)[perm] * gate_scale[:, None]
    bias = jnp.pad(bias, ((0, 0), (0, HP - H))).reshape(1, 4 * HP)

    wfc = jnp.pad(params["w_fc"], ((0, 0), (0, HP - H)))                   # (1, HP)
    bfc = params["b_fc"].reshape(1, 1)

    x_sb1 = jnp.pad(x, ((0, BP - B), (0, 0))).T[:, :, None]                # (S, BP, 1)

    out = pl.pallas_call(
        _lstm_kernel,
        out_shape=jax.ShapeDtypeStruct((BP, 1), jnp.float32),
        grid=(n_btiles,),
        in_specs=[
            pl.BlockSpec((S, BT, 1), lambda b: (0, b, 0)),        # x: batch-tiled
            pl.BlockSpec((1, 4 * HP), lambda b: (0, 0)),          # W_ih^T (shared)
            pl.BlockSpec((HP, 4 * HP), lambda b: (0, 0)),         # W_hh^T (shared)
            pl.BlockSpec((1, 4 * HP), lambda b: (0, 0)),          # bias   (shared)
            pl.BlockSpec((1, HP), lambda b: (0, 0)),              # fc weight (shared)
            pl.BlockSpec(memory_space=pltpu.MemorySpace.SMEM),    # fc bias scalar
        ],
        out_specs=pl.BlockSpec((BT, 1), lambda b: (b, 0)),
        compiler_params=pltpu.CompilerParams(
            dimension_semantics=("parallel",)),                   # batch tiles -> both TCs on v7x
    )(x_sb1, wih, whh_t, bias, wfc, bfc)
    return out[:B]


def init_params(key, input_size=1, hidden_size=50):
    """Deterministic init matching nn.LSTM / nn.Linear default U(-1/sqrt(H), 1/sqrt(H))."""
    k = 1.0 / np.sqrt(hidden_size)
    keys = jax.random.split(key, 6)
    u = lambda kk, shape: jax.random.uniform(kk, shape, jnp.float32, -k, k)
    return {
        "w_ih": u(keys[0], (4 * hidden_size, input_size)),
        "w_hh": u(keys[1], (4 * hidden_size, hidden_size)),
        "b_ih": u(keys[2], (4 * hidden_size,)),
        "b_hh": u(keys[3], (4 * hidden_size,)),
        "w_fc": u(keys[4], (1, hidden_size)),
        "b_fc": u(keys[5], (1,)),
    }


def lstm_ref(x, params):
    """Pure-JAX reference reproducing the PyTorch module semantics."""
    B, S = x.shape
    H = params["w_hh"].shape[1]
    w_ih, w_hh = params["w_ih"], params["w_hh"]
    b = params["b_ih"] + params["b_hh"]

    def step(carry, x_t):
        h, c = carry
        gates = x_t[:, None] @ w_ih.T + h @ w_hh.T + b            # (B, 4H), [i,f,g,o]
        i = jax.nn.sigmoid(gates[:, :H])
        f = jax.nn.sigmoid(gates[:, H:2 * H])
        g = jnp.tanh(gates[:, 2 * H:3 * H])
        o = jax.nn.sigmoid(gates[:, 3 * H:])
        c = f * c + i * g
        h = o * jnp.tanh(c)
        return (h, c), None

    h0 = jnp.zeros((B, H), jnp.float32)
    c0 = jnp.zeros((B, H), jnp.float32)
    (h, _), _ = lax.scan(step, (h0, c0), x.T)
    return h @ params["w_fc"].T + params["b_fc"]


if __name__ == "__main__":
    key = jax.random.PRNGKey(0)
    kx, kp = jax.random.split(key)

    B, S, H = 4, 8, 50                       # batch=4, seq=8, hidden=50 (module default)
    x = jax.random.normal(kx, (B, S), jnp.float32)
    params = init_params(kp, input_size=1, hidden_size=H)

    out = lstm_forward(x, params)
    jax.block_until_ready(out)

    ref = lstm_ref(x, params)
    np.testing.assert_allclose(np.asarray(out), np.asarray(ref), rtol=1e-4, atol=1e-5)

    print("KERNEL_OK")
</pallas_src>

<mosaic_0001>
module attributes {stable_mosaic.version = 11 : i64} {
  func.func @_lstm_kernel(%arg0: i32, %arg1: memref<8x8x1xf32, #tpu.memory_space<vmem>>, %arg2: memref<1x512xf32, #tpu.memory_space<vmem>>, %arg3: memref<128x512xf32, #tpu.memory_space<vmem>>, %arg4: memref<1x512xf32, #tpu.memory_space<vmem>>, %arg5: memref<1x128xf32, #tpu.memory_space<vmem>>, %arg6: memref<1x1xf32, #tpu.memory_space<smem>>, %arg7: memref<8x1xf32, #tpu.memory_space<vmem>>) attributes {dimension_semantics = [#tpu.dimension_semantics<parallel>], iteration_bounds = array<i64: 1>, scalar_prefetch = 0 : i64, scratch_operands = 0 : i64, tpu.core_type = #tpu.core_type<tc>, window_params = [{transform_indices = @transform_0, window_bounds = array<i64: 8, 8, 1>}, {pipeline_mode = #tpu.pipeline_mode<synchronous>, transform_indices = @transform_1, window_bounds = array<i64: 1, 512>}, {pipeline_mode = #tpu.pipeline_mode<synchronous>, transform_indices = @transform_2, window_bounds = array<i64: 128, 512>}, {pipeline_mode = #tpu.pipeline_mode<synchronous>, transform_indices = @transform_3, window_bounds = array<i64: 1, 512>}, {pipeline_mode = #tpu.pipeline_mode<synchronous>, transform_indices = @transform_4, window_bounds = array<i64: 1, 128>}, {transform_indices = @transform_5, window_bounds = array<i64: 1, 1>}, {transform_indices = @transform_6, window_bounds = array<i64: 8, 1>}]} {
    %cst = arith.constant 0.000000e+00 : f32
    %0 = vector.broadcast %cst : f32 to vector<8x128xf32>
    %cst_0 = arith.constant 0.000000e+00 : f32
    %1 = vector.broadcast %cst_0 : f32 to vector<8x128xf32>
    %c0_i32 = arith.constant 0 : i32
    %2 = arith.index_cast %c0_i32 : i32 to index
    %c0 = arith.constant 0 : index
    %c0_1 = arith.constant 0 : index
    %3 = vector.load %arg1[%2, %c0, %c0_1] : memref<8x8x1xf32, #tpu.memory_space<vmem>>, vector<1x8x1xf32>
    %4 = vector.shape_cast %3 : vector<1x8x1xf32> to vector<8x1xf32>
    %c0_2 = arith.constant 0 : index
    %c0_3 = arith.constant 0 : index
    %5 = vector.load %arg2[%c0_2, %c0_3] : memref<1x512xf32, #tpu.memory_space<vmem>>, vector<1x512xf32>
    %6 = vector.broadcast %4 : vector<8x1xf32> to vector<8x512xf32>
    %7 = vector.broadcast %5 : vector<1x512xf32> to vector<8x512xf32>
    %8 = arith.mulf %6, %7 : vector<8x512xf32>
    %c0_4 = arith.constant 0 : index
    %c0_5 = arith.constant 0 : index
    %9 = vector.load %arg4[%c0_4, %c0_5] : memref<1x512xf32, #tpu.memory_space<vmem>>, vector<1x512xf32>
    %10 = vector.broadcast %9 : vector<1x512xf32> to vector<8x512xf32>
    %11 = arith.addf %8, %10 : vector<8x512xf32>
    %c0_6 = arith.constant 0 : index
    %c0_7 = arith.constant 0 : index
    %12 = vector.load %arg3[%c0_6, %c0_7] : memref<128x512xf32, #tpu.memory_space<vmem>>, vector<128x512xf32>
    %cst_8 = arith.constant dense<0.000000e+00> : vector<8x512xf32>
    %13 = tpu.matmul %0, %12, %cst_8 {dimension_numbers = #tpu.dot_dimension_numbers<[1], [0], [0], [1], [0, 0, 1, 1], [], []>} : vector<8x128xf32>, vector<128x512xf32>, vector<8x512xf32> -> vector<8x512xf32>
    %14 = arith.addf %11, %13 : vector<8x512xf32>
    %15 = math.tanh %14 : vector<8x512xf32>
    %16 = vector.extract_strided_slice %15 {offsets = [0, 0], sizes = [8, 384], strides = [1, 1]} : vector<8x512xf32> to vector<8x384xf32>
    %cst_9 = arith.constant 5.000000e-01 : f32
    %17 = vector.broadcast %cst_9 : f32 to vector<8x384xf32>
    %18 = arith.mulf %17, %16 : vector<8x384xf32>
    %cst_10 = arith.constant 5.000000e-01 : f32
    %19 = vector.broadcast %cst_10 : f32 to vector<8x384xf32>
    %20 = arith.addf %18, %19 : vector<8x384xf32>
    %21 = vector.extract_strided_slice %20 {offsets = [0, 0], sizes = [8, 128], strides = [1, 1]} : vector<8x384xf32> to vector<8x128xf32>
    %22 = vector.extract_strided_slice %20 {offsets = [0, 128], sizes = [8, 128], strides = [1, 1]} : vector<8x384xf32> to vector<8x128xf32>
    %23 = vector.extract_strided_slice %20 {offsets = [0, 256], sizes = [8, 128], strides = [1, 1]} : vector<8x384xf32> to vector<8x128xf32>
    %24 = vector.extract_strided_slice %15 {offsets = [0, 384], sizes = [8, 128], strides = [1, 1]} : vector<8x512xf32> to vector<8x128xf32>
    %25 = arith.mulf %22, %1 : vector<8x128xf32>
    %26 = arith.mulf %21, %24 : vector<8x128xf32>
    %27 = arith.addf %25, %26 : vector<8x128xf32>
    %28 = math.tanh %27 : vector<8x128xf32>
    %29 = arith.mulf %23, %28 : vector<8x128xf32>
    %c1_i32 = arith.constant 1 : i32
    %30 = arith.index_cast %c1_i32 : i32 to index
    %c0_11 = arith.constant 0 : index
    %c0_12 = arith.constant 0 : index
    %31 = vector.load %arg1[%30, %c0_11, %c0_12] : memref<8x8x1xf32, #tpu.memory_space<vmem>>, vector<1x8x1xf32>
    %32 = vector.shape_cast %31 : vector<1x8x1xf32> to vector<8x1xf32>
    %c0_13 = arith.constant 0 : index
    %c0_14 = arith.constant 0 : index
    %33 = vector.load %arg2[%c0_13, %c0_14] : memref<1x512xf32, #tpu.memory_space<vmem>>, vector<1x512xf32>
    %34 = vector.broadcast %32 : vector<8x1xf32> to vector<8x512xf32>
    %35 = vector.broadcast %33 : vector<1x512xf32> to vector<8x512xf32>
    %36 = arith.mulf %34, %35 : vector<8x512xf32>
    %c0_15 = arith.constant 0 : index
    %c0_16 = arith.constant 0 : index
    %37 = vector.load %arg4[%c0_15, %c0_16] : memref<1x512xf32, #tpu.memory_space<vmem>>, vector<1x512xf32>
    %38 = vector.broadcast %37 : vector<1x512xf32> to vector<8x512xf32>
    %39 = arith.addf %36, %38 : vector<8x512xf32>
    %c0_17 = arith.constant 0 : index
    %c0_18 = arith.constant 0 : index
    %40 = vector.load %arg3[%c0_17, %c0_18] : memref<128x512xf32, #tpu.memory_space<vmem>>, vector<128x512xf32>
    %cst_19 = arith.constant dense<0.000000e+00> : vector<8x512xf32>
    %41 = tpu.matmul %29, %40, %cst_19 {dimension_numbers = #tpu.dot_dimension_numbers<[1], [0], [0], [1], [0, 0, 1, 1], [], []>} : vector<8x128xf32>, vector<128x512xf32>, vector<8x512xf32> -> vector<8x512xf32>
    %42 = arith.addf %39, %41 : vector<8x512xf32>
    %43 = math.tanh %42 : vector<8x512xf32>
    %44 = vector.extract_strided_slice %43 {offsets = [0, 0], sizes = [8, 384], strides = [1, 1]} : vector<8x512xf32> to vector<8x384xf32>
    %cst_20 = arith.constant 5.000000e-01 : f32
    %45 = vector.broadcast %cst_20 : f32 to vector<8x384xf32>
    %46 = arith.mulf %45, %44 : vector<8x384xf32>
    %cst_21 = arith.constant 5.000000e-01 : f32
    %47 = vector.broadcast %cst_21 : f32 to vector<8x384xf32>
    %48 = arith.addf %46, %47 : vector<8x384xf32>
    %49 = vector.extract_strided_slice %48 {offsets = [0, 0], sizes = [8, 128], strides = [1, 1]} : vector<8x384xf32> to vector<8x128xf32>
    %50 = vector.extract_strided_slice %48 {offsets = [0, 128], sizes = [8, 128], strides = [1, 1]} : vector<8x384xf32> to vector<8x128xf32>
    %51 = vector.extract_strided_slice %48 {offsets = [0, 256], sizes = [8, 128], strides = [1, 1]} : vector<8x384xf32> to vector<8x128xf32>
    %52 = vector.extract_strided_slice %43 {offsets = [0, 384], sizes = [8, 128], strides = [1, 1]} : vector<8x512xf32> to vector<8x128xf32>
    %53 = arith.mulf %50, %27 : vector<8x128xf32>
    %54 = arith.mulf %49, %52 : vector<8x128xf32>
    %55 = arith.addf %53, %54 : vector<8x128xf32>
    %56 = math.tanh %55 : vector<8x128xf32>
    %57 = arith.mulf %51, %56 : vector<8x128xf32>
    %c2_i32 = arith.constant 2 : i32
    %58 = arith.index_cast %c2_i32 : i32 to index
    %c0_22 = arith.constant 0 : index
    %c0_23 = arith.constant 0 : index
    %59 = vector.load %arg1[%58, %c0_22, %c0_23] : memref<8x8x1xf32, #tpu.memory_space<vmem>>, vector<1x8x1xf32>
    %60 = vector.shape_cast %59 : vector<1x8x1xf32> to vector<8x1xf32>
    %c0_24 = arith.constant 0 : index
    %c0_25 = arith.constant 0 : index
    %61 = vector.load %arg2[%c0_24, %c0_25] : memref<1x512xf32, #tpu.memory_space<vmem>>, vector<1x512xf32>
    %62 = vector.broadcast %60 : vector<8x1xf32> to vector<8x512xf32>
    %63 = vector.broadcast %61 : vector<1x512xf32> to vector<8x512xf32>
    %64 = arith.mulf %62, %63 : vector<8x512xf32>
    %c0_26 = arith.constant 0 : index
    %c0_27 = arith.constant 0 : index
    %65 = vector.load %arg4[%c0_26, %c0_27] : memref<1x512xf32, #tpu.memory_space<vmem>>, vector<1x512xf32>
    %66 = vector.broadcast %65 : vector<1x512xf32> to vector<8x512xf32>
    %67 = arith.addf %64, %66 : vector<8x512xf32>
    %c0_28 = arith.constant 0 : index
    %c0_29 = arith.constant 0 : index
    %68 = vector.load %arg3[%c0_28, %c0_29] : memref<128x512xf32, #tpu.memory_space<vmem>>, vector<128x512xf32>
    %cst_30 = arith.constant dense<0.000000e+00> : vector<8x512xf32>
    %69 = tpu.matmul %57, %68, %cst_30 {dimension_numbers = #tpu.dot_dimension_numbers<[1], [0], [0], [1], [0, 0, 1, 1], [], []>} : vector<8x128xf32>, vector<128x512xf32>, vector<8x512xf32> -> vector<8x512xf32>
    %70 = arith.addf %67, %69 : vector<8x512xf32>
    %71 = math.tanh %70 : vector<8x512xf32>
    %72 = vector.extract_strided_slice %71 {offsets = [0, 0], sizes = [8, 384], strides = [1, 1]} : vector<8x512xf32> to vector<8x384xf32>
    %cst_31 = arith.constant 5.000000e-01 : f32
    %73 = vector.broadcast %cst_31 : f32 to vector<8x384xf32>
    %74 = arith.mulf %73, %72 : vector<8x384xf32>
    %cst_32 = arith.constant 5.000000e-01 : f32
    %75 = vector.broadcast %cst_32 : f32 to vector<8x384xf32>
    %76 = arith.addf %74, %75 : vector<8x384xf32>
    %77 = vector.extract_strided_slice %76 {offsets = [0, 0], sizes = [8, 128], strides = [1, 1]} : vector<8x384xf32> to vector<8x128xf32>
    %78 = vector.extract_strided_slice %76 {offsets = [0, 128], sizes = [8, 128], strides = [1, 1]} : vector<8x384xf32> to vector<8x128xf32>
    %79 = vector.extract_strided_slice %76 {offsets = [0, 256], sizes = [8, 128], strides = [1, 1]} : vector<8x384xf32> to vector<8x128xf32>
    %80 = vector.extract_strided_slice %71 {offsets = [0, 384], sizes = [8, 128], strides = [1, 1]} : vector<8x512xf32> to vector<8x128xf32>
    %81 = arith.mulf %78, %55 : vector<8x128xf32>
    %82 = arith.mulf %77, %80 : vector<8x128xf32>
    %83 = arith.addf %81, %82 : vector<8x128xf32>
    %84 = math.tanh %83 : vector<8x128xf32>
    %85 = arith.mulf %79, %84 : vector<8x128xf32>
    %c3_i32 = arith.constant 3 : i32
    %86 = arith.index_cast %c3_i32 : i32 to index
    %c0_33 = arith.constant 0 : index
    %c0_34 = arith.constant 0 : index
    %87 = vector.load %arg1[%86, %c0_33, %c0_34] : memref<8x8x1xf32, #tpu.memory_space<vmem>>, vector<1x8x1xf32>
    %88 = vector.shape_cast %87 : vector<1x8x1xf32> to vector<8x1xf32>
    %c0_35 = arith.constant 0 : index
    %c0_36 = arith.constant 0 : index
    %89 = vector.load %arg2[%c0_35, %c0_36] : memref<1x512xf32, #tpu.memory_space<vmem>>, vector<1x512xf32>
    %90 = vector.broadcast %88 : vector<8x1xf32> to vector<8x512xf32>
    %91 = vector.broadcast %89 : vector<1x512xf32> to vector<8x512xf32>
    %92 = arith.mulf %90, %91 : vector<8x512xf32>
    %c0_37 = arith.constant 0 : index
    %c0_38 = arith.constant 0 : index
    %93 = vector.load %arg4[%c0_37, %c0_38] : memref<1x512xf32, #tpu.memory_space<vmem>>, vector<1x512xf32>
    %94 = vector.broadcast %93 : vector<1x512xf32> to vector<8x512xf32>
    %95 = arith.addf %92, %94 : vector<8x512xf32>
    %c0_39 = arith.constant 0 : index
    %c0_40 = arith.constant 0 : index
    %96 = vector.load %arg3[%c0_39, %c0_40] : memref<128x512xf32, #tpu.memory_space<vmem>>, vector<128x512xf32>
    %cst_41 = arith.constant dense<0.000000e+00> : vector<8x512xf32>
    %97 = tpu.matmul %85, %96, %cst_41 {dimension_numbers = #tpu.dot_dimension_numbers<[1], [0], [0], [1], [0, 0, 1, 1], [], []>} : vector<8x128xf32>, vector<128x512xf32>, vector<8x512xf32> -> vector<8x512xf32>
    %98 = arith.addf %95, %97 : vector<8x512xf32>
    %99 = math.tanh %98 : vector<8x512xf32>
    %100 = vector.extract_strided_slice %99 {offsets = [0, 0], sizes = [8, 384], strides = [1, 1]} : vector<8x512xf32> to vector<8x384xf32>
    %cst_42 = arith.constant 5.000000e-01 : f32
    %101 = vector.broadcast %cst_42 : f32 to vector<8x384xf32>
    %102 = arith.mulf %101, %100 : vector<8x384xf32>
    %cst_43 = arith.constant 5.000000e-01 : f32
    %103 = vector.broadcast %cst_43 : f32 to vector<8x384xf32>
    %104 = arith.addf %102, %103 : vector<8x384xf32>
    %105 = vector.extract_strided_slice %104 {offsets = [0, 0], sizes = [8, 128], strides = [1, 1]} : vector<8x384xf32> to vector<8x128xf32>
    %106 = vector.extract_strided_slice %104 {offsets = [0, 128], sizes = [8, 128], strides = [1, 1]} : vector<8x384xf32> to vector<8x128xf32>
    %107 = vector.extract_strided_slice %104 {offsets = [0, 256], sizes = [8, 128], strides = [1, 1]} : vector<8x384xf32> to vector<8x128xf32>
    %108 = vector.extract_strided_slice %99 {offsets = [0, 384], sizes = [8, 128], strides = [1, 1]} : vector<8x512xf32> to vector<8x128xf32>
    %109 = arith.mulf %106, %83 : vector<8x128xf32>
    %110 = arith.mulf %105, %108 : vector<8x128xf32>
    %111 = arith.addf %109, %110 : vector<8x128xf32>
    %112 = math.tanh %111 : vector<8x128xf32>
    %113 = arith.mulf %107, %112 : vector<8x128xf32>
    %c4_i32 = arith.constant 4 : i32
    %114 = arith.index_cast %c4_i32 : i32 to index
    %c0_44 = arith.constant 0 : index
    %c0_45 = arith.constant 0 : index
    %115 = vector.load %arg1[%114, %c0_44, %c0_45] : memref<8x8x1xf32, #tpu.memory_space<vmem>>, vector<1x8x1xf32>
    %116 = vector.shape_cast %115 : vector<1x8x1xf32> to vector<8x1xf32>
    %c0_46 = arith.constant 0 : index
    %c0_47 = arith.constant 0 : index
    %117 = vector.load %arg2[%c0_46, %c0_47] : memref<1x512xf32, #tpu.memory_space<vmem>>, vector<1x512xf32>
    %118 = vector.broadcast %116 : vector<8x1xf32> to vector<8x512xf32>
    %119 = vector.broadcast %117 : vector<1x512xf32> to vector<8x512xf32>
    %120 = arith.mulf %118, %119 : vector<8x512xf32>
    %c0_48 = arith.constant 0 : index
    %c0_49 = arith.constant 0 : index
    %121 = vector.load %arg4[%c0_48, %c0_49] : memref<1x512xf32, #tpu.memory_space<vmem>>, vector<1x512xf32>
    %122 = vector.broadcast %121 : vector<1x512xf32> to vector<8x512xf32>
    %123 = arith.addf %120, %122 : vector<8x512xf32>
    %c0_50 = arith.constant 0 : index
    %c0_51 = arith.constant 0 : index
    %124 = vector.load %arg3[%c0_50, %c0_51] : memref<128x512xf32, #tpu.memory_space<vmem>>, vector<128x512xf32>
    %cst_52 = arith.constant dense<0.000000e+00> : vector<8x512xf32>
    %125 = tpu.matmul %113, %124, %cst_52 {dimension_numbers = #tpu.dot_dimension_numbers<[1], [0], [0], [1], [0, 0, 1, 1], [], []>} : vector<8x128xf32>, vector<128x512xf32>, vector<8x512xf32> -> vector<8x512xf32>
    %126 = arith.addf %123, %125 : vector<8x512xf32>
    %127 = math.tanh %126 : vector<8x512xf32>
    %128 = vector.extract_strided_slice %127 {offsets = [0, 0], sizes = [8, 384], strides = [1, 1]} : vector<8x512xf32> to vector<8x384xf32>
    %cst_53 = arith.constant 5.000000e-01 : f32
    %129 = vector.broadcast %cst_53 : f32 to vector<8x384xf32>
    %130 = arith.mulf %129, %128 : vector<8x384xf32>
    %cst_54 = arith.constant 5.000000e-01 : f32
    %131 = vector.broadcast %cst_54 : f32 to vector<8x384xf32>
    %132 = arith.addf %130, %131 : vector<8x384xf32>
    %133 = vector.extract_strided_slice %132 {offsets = [0, 0], sizes = [8, 128], strides = [1, 1]} : vector<8x384xf32> to vector<8x128xf32>
    %134 = vector.extract_strided_slice %132 {offsets = [0, 128], sizes = [8, 128], strides = [1, 1]} : vector<8x384xf32> to vector<8x128xf32>
    %135 = vector.extract_strided_slice %132 {offsets = [0, 256], sizes = [8, 128], strides = [1, 1]} : vector<8x384xf32> to vector<8x128xf32>
    %136 = vector.extract_strided_slice %127 {offsets = [0, 384], sizes = [8, 128], strides = [1, 1]} : vector<8x512xf32> to vector<8x128xf32>
    %137 = arith.mulf %134, %111 : vector<8x128xf32>
    %138 = arith.mulf %133, %136 : vector<8x128xf32>
    %139 = arith.addf %137, %138 : vector<8x128xf32>
    %140 = math.tanh %139 : vector<8x128xf32>
    %141 = arith.mulf %135, %140 : vector<8x128xf32>
    %c5_i32 = arith.constant 5 : i32
    %142 = arith.index_cast %c5_i32 : i32 to index
    %c0_55 = arith.constant 0 : index
    %c0_56 = arith.constant 0 : index
    %143 = vector.load %arg1[%142, %c0_55, %c0_56] : memref<8x8x1xf32, #tpu.memory_space<vmem>>, vector<1x8x1xf32>
    %144 = vector.shape_cast %143 : vector<1x8x1xf32> to vector<8x1xf32>
    %c0_57 = arith.constant 0 : index
    %c0_58 = arith.constant 0 : index
    %145 = vector.load %arg2[%c0_57, %c0_58] : memref<1x512xf32, #tpu.memory_space<vmem>>, vector<1x512xf32>
    %146 = vector.broadcast %144 : vector<8x1xf32> to vector<8x512xf32>
    %147 = vector.broadcast %145 : vector<1x512xf32> to vector<8x512xf32>
    %148 = arith.mulf %146, %147 : vector<8x512xf32>
    %c0_59 = arith.constant 0 : index
    %c0_60 = arith.constant 0 : index
    %149 = vector.load %arg4[%c0_59, %c0_60] : memref<1x512xf32, #tpu.memory_space<vmem>>, vector<1x512xf32>
    %150 = vector.broadcast %149 : vector<1x512xf32> to vector<8x512xf32>
    %151 = arith.addf %148, %150 : vector<8x512xf32>
    %c0_61 = arith.constant 0 : index
    %c0_62 = arith.constant 0 : index
    %152 = vector.load %arg3[%c0_61, %c0_62] : memref<128x512xf32, #tpu.memory_space<vmem>>, vector<128x512xf32>
    %cst_63 = arith.constant dense<0.000000e+00> : vector<8x512xf32>
    %153 = tpu.matmul %141, %152, %cst_63 {dimension_numbers = #tpu.dot_dimension_numbers<[1], [0], [0], [1], [0, 0, 1, 1], [], []>} : vector<8x128xf32>, vector<128x512xf32>, vector<8x512xf32> -> vector<8x512xf32>
    %154 = arith.addf %151, %153 : vector<8x512xf32>
    %155 = math.tanh %154 : vector<8x512xf32>
    %156 = vector.extract_strided_slice %155 {offsets = [0, 0], sizes = [8, 384], strides = [1, 1]} : vector<8x512xf32> to vector<8x384xf32>
    %cst_64 = arith.constant 5.000000e-01 : f32
    %157 = vector.broadcast %cst_64 : f32 to vector<8x384xf32>
    %158 = arith.mulf %157, %156 : vector<8x384xf32>
    %cst_65 = arith.constant 5.000000e-01 : f32
    %159 = vector.broadcast %cst_65 : f32 to vector<8x384xf32>
    %160 = arith.addf %158, %159 : vector<8x384xf32>
    %161 = vector.extract_strided_slice %160 {offsets = [0, 0], sizes = [8, 128], strides = [1, 1]} : vector<8x384xf32> to vector<8x128xf32>
    %162 = vector.extract_strided_slice %160 {offsets = [0, 128], sizes = [8, 128], strides = [1, 1]} : vector<8x384xf32> to vector<8x128xf32>
    %163 = vector.extract_strided_slice %160 {offsets = [0, 256], sizes = [8, 128], strides = [1, 1]} : vector<8x384xf32> to vector<8x128xf32>
    %164 = vector.extract_strided_slice %155 {offsets = [0, 384], sizes = [8, 128], strides = [1, 1]} : vector<8x512xf32> to vector<8x128xf32>
    %165 = arith.mulf %162, %139 : vector<8x128xf32>
    %166 = arith.mulf %161, %164 : vector<8x128xf32>
    %167 = arith.addf %165, %166 : vector<8x128xf32>
    %168 = math.tanh %167 : vector<8x128xf32>
    %169 = arith.mulf %163, %168 : vector<8x128xf32>
    %c6_i32 = arith.constant 6 : i32
    %170 = arith.index_cast %c6_i32 : i32 to index
    %c0_66 = arith.constant 0 : index
    %c0_67 = arith.constant 0 : index
    %171 = vector.load %arg1[%170, %c0_66, %c0_67] : memref<8x8x1xf32, #tpu.memory_space<vmem>>, vector<1x8x1xf32>
    %172 = vector.shape_cast %171 : vector<1x8x1xf32> to vector<8x1xf32>
    %c0_68 = arith.constant 0 : index
    %c0_69 = arith.constant 0 : index
    %173 = vector.load %arg2[%c0_68, %c0_69] : memref<1x512xf32, #tpu.memory_space<vmem>>, vector<1x512xf32>
    %174 = vector.broadcast %172 : vector<8x1xf32> to vector<8x512xf32>
    %175 = vector.broadcast %173 : vector<1x512xf32> to vector<8x512xf32>
    %176 = arith.mulf %174, %175 : vector<8x512xf32>
    %c0_70 = arith.constant 0 : index
    %c0_71 = arith.constant 0 : index
    %177 = vector.load %arg4[%c0_70, %c0_71] : memref<1x512xf32, #tpu.memory_space<vmem>>, vector<1x512xf32>
    %178 = vector.broadcast %177 : vector<1x512xf32> to vector<8x512xf32>
    %179 = arith.addf %176, %178 : vector<8x512xf32>
    %c0_72 = arith.constant 0 : index
    %c0_73 = arith.constant 0 : index
    %180 = vector.load %arg3[%c0_72, %c0_73] : memref<128x512xf32, #tpu.memory_space<vmem>>, vector<128x512xf32>
    %cst_74 = arith.constant dense<0.000000e+00> : vector<8x512xf32>
    %181 = tpu.matmul %169, %180, %cst_74 {dimension_numbers = #tpu.dot_dimension_numbers<[1], [0], [0], [1], [0, 0, 1, 1], [], []>} : vector<8x128xf32>, vector<128x512xf32>, vector<8x512xf32> -> vector<8x512xf32>
    %182 = arith.addf %179, %181 : vector<8x512xf32>
    %183 = math.tanh %182 : vector<8x512xf32>
    %184 = vector.extract_strided_slice %183 {offsets = [0, 0], sizes = [8, 384], strides = [1, 1]} : vector<8x512xf32> to vector<8x384xf32>
    %cst_75 = arith.constant 5.000000e-01 : f32
    %185 = vector.broadcast %cst_75 : f32 to vector<8x384xf32>
    %186 = arith.mulf %185, %184 : vector<8x384xf32>
    %cst_76 = arith.constant 5.000000e-01 : f32
    %187 = vector.broadcast %cst_76 : f32 to vector<8x384xf32>
    %188 = arith.addf %186, %187 : vector<8x384xf32>
    %189 = vector.extract_strided_slice %188 {offsets = [0, 0], sizes = [8, 128], strides = [1, 1]} : vector<8x384xf32> to vector<8x128xf32>
    %190 = vector.extract_strided_slice %188 {offsets = [0, 128], sizes = [8, 128], strides = [1, 1]} : vector<8x384xf32> to vector<8x128xf32>
    %191 = vector.extract_strided_slice %188 {offsets = [0, 256], sizes = [8, 128], strides = [1, 1]} : vector<8x384xf32> to vector<8x128xf32>
    %192 = vector.extract_strided_slice %183 {offsets = [0, 384], sizes = [8, 128], strides = [1, 1]} : vector<8x512xf32> to vector<8x128xf32>
    %193 = arith.mulf %190, %167 : vector<8x128xf32>
    %194 = arith.mulf %189, %192 : vector<8x128xf32>
    %195 = arith.addf %193, %194 : vector<8x128xf32>
    %196 = math.tanh %195 : vector<8x128xf32>
    %197 = arith.mulf %191, %196 : vector<8x128xf32>
    %c7_i32 = arith.constant 7 : i32
    %198 = arith.index_cast %c7_i32 : i32 to index
    %c0_77 = arith.constant 0 : index
    %c0_78 = arith.constant 0 : index
    %199 = vector.load %arg1[%198, %c0_77, %c0_78] : memref<8x8x1xf32, #tpu.memory_space<vmem>>, vector<1x8x1xf32>
    %200 = vector.shape_cast %199 : vector<1x8x1xf32> to vector<8x1xf32>
    %c0_79 = arith.constant 0 : index
    %c0_80 = arith.constant 0 : index
    %201 = vector.load %arg2[%c0_79, %c0_80] : memref<1x512xf32, #tpu.memory_space<vmem>>, vector<1x512xf32>
    %202 = vector.broadcast %200 : vector<8x1xf32> to vector<8x512xf32>
    %203 = vector.broadcast %201 : vector<1x512xf32> to vector<8x512xf32>
    %204 = arith.mulf %202, %203 : vector<8x512xf32>
    %c0_81 = arith.constant 0 : index
    %c0_82 = arith.constant 0 : index
    %205 = vector.load %arg4[%c0_81, %c0_82] : memref<1x512xf32, #tpu.memory_space<vmem>>, vector<1x512xf32>
    %206 = vector.broadcast %205 : vector<1x512xf32> to vector<8x512xf32>
    %207 = arith.addf %204, %206 : vector<8x512xf32>
    %c0_83 = arith.constant 0 : index
    %c0_84 = arith.constant 0 : index
    %208 = vector.load %arg3[%c0_83, %c0_84] : memref<128x512xf32, #tpu.memory_space<vmem>>, vector<128x512xf32>
    %cst_85 = arith.constant dense<0.000000e+00> : vector<8x512xf32>
    %209 = tpu.matmul %197, %208, %cst_85 {dimension_numbers = #tpu.dot_dimension_numbers<[1], [0], [0], [1], [0, 0, 1, 1], [], []>} : vector<8x128xf32>, vector<128x512xf32>, vector<8x512xf32> -> vector<8x512xf32>
    %210 = arith.addf %207, %209 : vector<8x512xf32>
    %211 = math.tanh %210 : vector<8x512xf32>
    %212 = vector.extract_strided_slice %211 {offsets = [0, 0], sizes = [8, 384], strides = [1, 1]} : vector<8x512xf32> to vector<8x384xf32>
    %cst_86 = arith.constant 5.000000e-01 : f32
    %213 = vector.broadcast %cst_86 : f32 to vector<8x384xf32>
    %214 = arith.mulf %213, %212 : vector<8x384xf32>
    %cst_87 = arith.constant 5.000000e-01 : f32
    %215 = vector.broadcast %cst_87 : f32 to vector<8x384xf32>
    %216 = arith.addf %214, %215 : vector<8x384xf32>
    %217 = vector.extract_strided_slice %216 {offsets = [0, 0], sizes = [8, 128], strides = [1, 1]} : vector<8x384xf32> to vector<8x128xf32>
    %218 = vector.extract_strided_slice %216 {offsets = [0, 128], sizes = [8, 128], strides = [1, 1]} : vector<8x384xf32> to vector<8x128xf32>
    %219 = vector.extract_strided_slice %216 {offsets = [0, 256], sizes = [8, 128], strides = [1, 1]} : vector<8x384xf32> to vector<8x128xf32>
    %220 = vector.extract_strided_slice %211 {offsets = [0, 384], sizes = [8, 128], strides = [1, 1]} : vector<8x512xf32> to vector<8x128xf32>
    %221 = arith.mulf %218, %195 : vector<8x128xf32>
    %222 = arith.mulf %217, %220 : vector<8x128xf32>
    %223 = arith.addf %221, %222 : vector<8x128xf32>
    %224 = math.tanh %223 : vector<8x128xf32>
    %225 = arith.mulf %219, %224 : vector<8x128xf32>
    %c8_i32 = arith.constant 8 : i32
    %c0_88 = arith.constant 0 : index
    %c0_89 = arith.constant 0 : index
    %226 = vector.load %arg5[%c0_88, %c0_89] : memref<1x128xf32, #tpu.memory_space<vmem>>, vector<1x128xf32>
    %227 = vector.broadcast %226 : vector<1x128xf32> to vector<8x128xf32>
    %228 = arith.mulf %225, %227 : vector<8x128xf32>
    %cst_90 = arith.constant dense<0.000000e+00> : vector<8xf32>
    %229 = vector.multi_reduction <add>, %228, %cst_90 [1] : vector<8x128xf32> to vector<8xf32>
    %230 = vector.shape_cast %229 : vector<8xf32> to vector<8x1xf32>
    %c0_91 = arith.constant 0 : index
    %c0_92 = arith.constant 0 : index
    %231 = memref.load %arg6[%c0_91, %c0_92] : memref<1x1xf32, #tpu.memory_space<smem>>
    %232 = vector.broadcast %231 : f32 to vector<8x1xf32>
    %233 = arith.addf %230, %232 : vector<8x1xf32>
    %c0_93 = arith.constant 0 : index
    %c0_94 = arith.constant 0 : index
    %234 = vector.load %arg7[%c0_93, %c0_94] : memref<8x1xf32, #tpu.memory_space<vmem>>, vector<8x1xf32>
    tpu.vector_store %arg7[%c0_93, %c0_94], %233 {strides = array<i32>} : memref<8x1xf32, #tpu.memory_space<vmem>>, vector<8x1xf32>,
    return
  }
  func.func @transform_0(%arg0: i32) -> (i32, i32, i32) {
    %c0_i32 = arith.constant 0 : i32
    %c0_i32_0 = arith.constant 0 : i32
    %c0_i32_1 = arith.constant 0 : i32
    return %c0_i32, %arg0, %c0_i32_0 : i32, i32, i32
  }
  func.func @transform_1(%arg0: i32) -> (i32, i32) {
    %c0_i32 = arith.constant 0 : i32
    %c0_i32_0 = arith.constant 0 : i32
    %c0_i32_1 = arith.constant 0 : i32
    return %c0_i32, %c0_i32_0 : i32, i32
  }
  func.func @transform_2(%arg0: i32) -> (i32, i32) {
    %c0_i32 = arith.constant 0 : i32
    %c0_i32_0 = arith.constant 0 : i32
    %c0_i32_1 = arith.constant 0 : i32
    return %c0_i32, %c0_i32_0 : i32, i32
  }
  func.func @transform_3(%arg0: i32) -> (i32, i32) {
    %c0_i32 = arith.constant 0 : i32
    %c0_i32_0 = arith.constant 0 : i32
    %c0_i32_1 = arith.constant 0 : i32
    return %c0_i32, %c0_i32_0 : i32, i32
  }
  func.func @transform_4(%arg0: i32) -> (i32, i32) {
    %c0_i32 = arith.constant 0 : i32
    %c0_i32_0 = arith.constant 0 : i32
    %c0_i32_1 = arith.constant 0 : i32
    return %c0_i32, %c0_i32_0 : i32, i32
  }
  func.func @transform_5(%arg0: i32) -> (i32, i32) {
    %c0_i32 = arith.constant 0 : i32
    %c0_i32_0 = arith.constant 0 : i32
    %c0_i32_1 = arith.constant 0 : i32
    return %c0_i32, %c0_i32_0 : i32, i32
  }
  func.func @transform_6(%arg0: i32) -> (i32, i32) {
    %c0_i32 = arith.constant 0 : i32
    %c0_i32_0 = arith.constant 0 : i32
    return %arg0, %c0_i32 : i32, i32
  }
}

</mosaic_0001>

<llo_original>
// kernel: tpu_custom_call.1
$region0: #{tpu_custom_call.1}
  #allocation0 [shape = 'u32[]', space=smem, size = 0x4, offset = 0x4, fixed_abs, tag = 'smem constant byte address 0x4 - core index']
  #allocation1 [shape = 'u32[144,128]{1,0:T(1,128)}', space=vmem, size = 0x12000, scoped, tag = 'internal scratch']
  #allocation2 [shape = 'f32[1,1]{1,0:T(1,128)S(6)}', space=smem, size = 0x200, scoped, tag = 'scoped memory for tpu_custom_call.1']
  %s0 = inlined_call_operand.vmem [shape: f32[8,8,1], index: 0, kind: input, shape index: {}]
  %s1 = inlined_call_operand.vmem [shape: f32[1,512], index: 1, kind: input, shape index: {}]
  %s2 = inlined_call_operand.hbm [shape: f32[128,512], index: 2, kind: input, shape index: {}]
  %s3 = inlined_call_operand.vmem [shape: f32[1,512], index: 3, kind: input, shape index: {}]
  %s4 = inlined_call_operand.vmem [shape: f32[1,128], index: 4, kind: input, shape index: {}]
  %s5 = inlined_call_operand.<no memory space> [shape: f32[1,1], index: 5, kind: input, shape index: {}]
  %s6 = inlined_call_operand.vmem [shape: f32[8,1], index: 6, kind: output, shape index: {}]
  %s7 = sld [smem:[#allocation0]]
  $region38: #{tpu_custom_call.1} parent=0
    _
  %s9 = ssub.s32 1, %s7
  %s10 = scalar_select 0, %s9, %s7
  %11 = sst [smem:[#allocation2]] %s5
  $region1: #{tpu_custom_call.1} parent=0
    #allocation3 [shape = 'u8[262144]{0}', space=vmem, size = 0x40000, scoped, tag = 'input window, operand 2, single buffered']
    #allocation4 [shape = 's32[1]{0}', space=sflag, size = 0x4, scoped, tag = 'scoped memory for tpu_custom_call.1']
    %12 = vsyncpa [#allocation4], 0
    // Predicated region
    $region2: #{tpu_custom_call.1} parent=1 // pred_check
      _
    $region3: #{tpu_custom_call.1} parent=1 // pred_check_branch
      %14 = sbr.rel (0) target = $region5
    $region4: #{tpu_custom_call.1} parent=1 // pred_region
      _
    $region5: #{tpu_custom_call.1} parent=1 // pred_fallthru
      _
    // Predicated region
    $region6: #{tpu_custom_call.1} parent=1 // pred_check
      _
    $region7: #{tpu_custom_call.1} parent=1 // pred_check_branch
      %16 = sbr.rel (0) target = $region9
    $region8: #{tpu_custom_call.1} parent=1 // pred_region
      _
    $region9: #{tpu_custom_call.1} parent=1 // pred_fallthru
      _
    // Predicated region
    $region10: #{tpu_custom_call.1} parent=1 // pred_check
      _
    $region11: #{tpu_custom_call.1} parent=1 // pred_check_branch
      %18 = sbr.rel (0) target = $region13
    $region12: #{tpu_custom_call.1} parent=1 // pred_region
      %s20 = ssub.s32 8192, 8192
      %21 = vsyncadd [#allocation4], %s20
      %s22 = sshll.u32 [#allocation3], 4
      %s23 = int_to_ptr.vmem [resolvable:$true] %s22
      %28 = dma.hbm_to_vmem [thread:$0]  %s2, 8192, %s23, [#allocation4], 512, 512, 32
    $region13: #{tpu_custom_call.1} parent=1 // pred_fallthru
      _
    // Predicated region
    $region14: #{tpu_custom_call.1} parent=1 // pred_check
      _
    $region15: #{tpu_custom_call.1} parent=1 // pred_check_branch
      %30 = sbr.rel (0) target = $region17
    $region16: #{tpu_custom_call.1} parent=1 // pred_region
      _
    $region17: #{tpu_custom_call.1} parent=1 // pred_fallthru
      _
    // Predicated region
    $region18: #{tpu_custom_call.1} parent=1 // pred_check
      _
    $region19: #{tpu_custom_call.1} parent=1 // pred_check_branch
      %32 = sbr.rel (0) target = $region21
    $region20: #{tpu_custom_call.1} parent=1 // pred_region
      _
    $region21: #{tpu_custom_call.1} parent=1 // pred_fallthru
      _
    // Predicated region
    $region22: #{tpu_custom_call.1} parent=1 // pred_check
      _
    $region23: #{tpu_custom_call.1} parent=1 // pred_check_branch
      %34 = sbr.rel (0) target = $region25
    $region24: #{tpu_custom_call.1} parent=1 // pred_region
      _
    $region25: #{tpu_custom_call.1} parent=1 // pred_fallthru
      _
    // Predicated region
    $region26: #{tpu_custom_call.1} parent=1 // pred_check
      _
    $region27: #{tpu_custom_call.1} parent=1 // pred_check_branch
      %36 = sbr.rel (0) target = $region29
    $region28: #{tpu_custom_call.1} parent=1 // pred_region
      %37 = dma.done [#allocation4], 8192
    $region29: #{tpu_custom_call.1} parent=1 // pred_fallthru
      _
    %v38 = vld [vmem:[%s0] sm:$0xff]
    %v39 = vld [vmem:[%s1] sm:$0xf]
    %41 = vset.pattern.permute.xlu0 0
    %42 = vperm.xlu0 %41, %v38
    %v43 = vpop.permute.xlu0 %42
    %v46 = vlaneseq
    %v47 = vshrl.u32 %v46, 7
    %v48 = vsub.s32 0, %v47
    %v49 = vrot.slane %v39, %v48
    %v50 = vlaneseq
    %v51 = vshrl.u32 %v50, 7
    %v52 = vsub.s32 1, %v51
    %v53 = vrot.slane %v39, %v52
    %v54 = vlaneseq
    %v55 = vshrl.u32 %v54, 7
    %v56 = vsub.s32 2, %v55
    %v57 = vrot.slane %v39, %v56
    %v58 = vlaneseq
    %v59 = vshrl.u32 %v58, 7
    %v60 = vsub.s32 3, %v59
    %v61 = vrot.slane %v39, %v60
    %v66 = vmul.f32 %v43, %v49
    %v67 = vmul.f32 %v43, %v53
    %v68 = vmul.f32 %v43, %v57
    %v69 = vmul.f32 %v43, %v61
    %v70 = vld [vmem:[%s3] sm:$0xf]
    %v72 = vlaneseq
    %v73 = vshrl.u32 %v72, 7
    %v74 = vsub.s32 0, %v73
    %v75 = vrot.slane %v70, %v74
    %v76 = vlaneseq
    %v77 = vshrl.u32 %v76, 7
    %v78 = vsub.s32 1, %v77
    %v79 = vrot.slane %v70, %v78
    %v80 = vlaneseq
    %v81 = vshrl.u32 %v80, 7
    %v82 = vsub.s32 2, %v81
    %v83 = vrot.slane %v70, %v82
    %v84 = vlaneseq
    %v85 = vshrl.u32 %v84, 7
    %v86 = vsub.s32 3, %v85
    %v87 = vrot.slane %v70, %v86
    %v92 = vadd.f32 %v66, %v75
    %v93 = vadd.f32 %v67, %v79
    %v94 = vadd.f32 %v68, %v83
    %v95 = vadd.f32 %v69, %v87
    %v96 = vld [vmem:[#allocation3] sm:$0xff]
    %v97 = vld [vmem:[#allocation3 + $0x8] sm:$0xff]
    %v98 = vld [vmem:[#allocation3 + $0x10] sm:$0xff]
    %v99 = vld [vmem:[#allocation3 + $0x18] sm:$0xff]
    %v100 = vld [vmem:[#allocation3 + $0x20] sm:$0xff]
    %v101 = vld [vmem:[#allocation3 + $0x28] sm:$0xff]
    %v102 = vld [vmem:[#allocation3 + $0x30] sm:$0xff]
    %v103 = vld [vmem:[#allocation3 + $0x38] sm:$0xff]
    %v104 = vld [vmem:[#allocation3 + $0x40] sm:$0xff]
    %v105 = vld [vmem:[#allocation3 + $0x48] sm:$0xff]
    %v106 = vld [vmem:[#allocation3 + $0x50] sm:$0xff]
    %v107 = vld [vmem:[#allocation3 + $0x58] sm:$0xff]
    %v108 = vld [vmem:[#allocation3 + $0x60] sm:$0xff]
    %v109 = vld [vmem:[#allocation3 + $0x68] sm:$0xff]
    %v110 = vld [vmem:[#allocation3 + $0x70] sm:$0xff]
    %v111 = vld [vmem:[#allocation3 + $0x78] sm:$0xff]
    %v112 = vld [vmem:[#allocation3 + $0x80] sm:$0xff]
    %v113 = vld [vmem:[#allocation3 + $0x88] sm:$0xff]
    %v114 = vld [vmem:[#allocation3 + $0x90] sm:$0xff]
    %v115 = vld [vmem:[#allocation3 + $0x98] sm:$0xff]
    %v116 = vld [vmem:[#allocation3 + $0xa0] sm:$0xff]
    %v117 = vld [vmem:[#allocation3 + $0xa8] sm:$0xff]
    %v118 = vld [vmem:[#allocation3 + $0xb0] sm:$0xff]
    %v119 = vld [vmem:[#allocation3 + $0xb8] sm:$0xff]
    %v120 = vld [vmem:[#allocation3 + $0xc0] sm:$0xff]
    %v121 = vld [vmem:[#allocation3 + $0xc8] sm:$0xff]
    %v122 = vld [vmem:[#allocation3 + $0xd0] sm:$0xff]
    %v123 = vld [vmem:[#allocation3 + $0xd8] sm:$0xff]
    %v124 = vld [vmem:[#allocation3 + $0xe0] sm:$0xff]
    %v125 = vld [vmem:[#allocation3 + $0xe8] sm:$0xff]
    %v126 = vld [vmem:[#allocation3 + $0xf0] sm:$0xff]
    %v127 = vld [vmem:[#allocation3 + $0xf8] sm:$0xff]
    %v128 = vld [vmem:[#allocation3 + $0x100] sm:$0xff]
    %v129 = vld [vmem:[#allocation3 + $0x108] sm:$0xff]
    %v130 = vld [vmem:[#allocation3 + $0x110] sm:$0xff]
    %v131 = vld [vmem:[#allocation3 + $0x118] sm:$0xff]
    %v132 = vld [vmem:[#allocation3 + $0x120] sm:$0xff]
    %v133 = vld [vmem:[#allocation3 + $0x128] sm:$0xff]
    %v134 = vld [vmem:[#allocation3 + $0x130] sm:$0xff]
    %v135 = vld [vmem:[#allocation3 + $0x138] sm:$0xff]
    %v136 = vld [vmem:[#allocation3 + $0x140] sm:$0xff]
    %v137 = vld [vmem:[#allocation3 + $0x148] sm:$0xff]
    %v138 = vld [vmem:[#allocation3 + $0x150] sm:$0xff]
    %v139 = vld [vmem:[#allocation3 + $0x158] sm:$0xff]
    %v140 = vld [vmem:[#allocation3 + $0x160] sm:$0xff]
    %v141 = vld [vmem:[#allocation3 + $0x168] sm:$0xff]
    %v142 = vld [vmem:[#allocation3 + $0x170] sm:$0xff]
    %v143 = vld [vmem:[#allocation3 + $0x178] sm:$0xff]
    %v144 = vld [vmem:[#allocation3 + $0x180] sm:$0xff]
    %v145 = vld [vmem:[#allocation3 + $0x188] sm:$0xff]
    %v146 = vld [vmem:[#allocation3 + $0x190] sm:$0xff]
    %v147 = vld [vmem:[#allocation3 + $0x198] sm:$0xff]
    %v148 = vld [vmem:[#allocation3 + $0x1a0] sm:$0xff]
    %v149 = vld [vmem:[#allocation3 + $0x1a8] sm:$0xff]
    %v150 = vld [vmem:[#allocation3 + $0x1b0] sm:$0xff]
    %v151 = vld [vmem:[#allocation3 + $0x1b8] sm:$0xff]
    %v152 = vld [vmem:[#allocation3 + $0x1c0] sm:$0xff]
    %v153 = vld [vmem:[#allocation3 + $0x1c8] sm:$0xff]
    %v154 = vld [vmem:[#allocation3 + $0x1d0] sm:$0xff]
    %v155 = vld [vmem:[#allocation3 + $0x1d8] sm:$0xff]
    %v156 = vld [vmem:[#allocation3 + $0x1e0] sm:$0xff]
    %v157 = vld [vmem:[#allocation3 + $0x1e8] sm:$0xff]
    %v158 = vld [vmem:[#allocation3 + $0x1f0] sm:$0xff]
    %v159 = vld [vmem:[#allocation3 + $0x1f8] sm:$0xff]
    %160 = vmatprep.subr.mxu0 %v97
    %161 = vmatpush1.msra.mxu0 %v96
    %162 = vmatprep.subr.mxu0 %v101
    %163 = vmatpush1.msra.mxu0 %v100
    %164 = vmatprep.subr.mxu0 %v105
    %165 = vmatpush1.msra.mxu0 %v104
    %166 = vmatprep.subr.mxu0 %v109
    %167 = vmatpush1.msra.mxu0 %v108
    %168 = vmatprep.subr.mxu0 %v113
    %169 = vmatpush1.msra.mxu0 %v112
    %170 = vmatprep.subr.mxu0 %v117
    %171 = vmatpush1.msra.mxu0 %v116
    %172 = vmatprep.subr.mxu0 %v121
    %173 = vmatpush1.msra.mxu0 %v120
    %174 = vmatprep.subr.mxu0 %v125
    %175 = vmatpush1.msra.mxu0 %v124
    %176 = vmatprep.subr.mxu0 %v129
    %177 = vmatpush1.msra.mxu0 %v128
    %178 = vmatprep.subr.mxu0 %v133
    %179 = vmatpush1.msra.mxu0 %v132
    %180 = vmatprep.subr.mxu0 %v137
    %181 = vmatpush1.msra.mxu0 %v136
    %182 = vmatprep.subr.mxu0 %v141
    %183 = vmatpush1.msra.mxu0 %v140
    %184 = vmatprep.subr.mxu0 %v145
    %185 = vmatpush1.msra.mxu0 %v144
    %186 = vmatprep.subr.mxu0 %v149
    %187 = vmatpush1.msra.mxu0 %v148
    %188 = vmatprep.subr.mxu0 %v153
    %189 = vmatpush1.msra.mxu0 %v152
    %190 = vmatprep.subr.mxu0 %v157
    %191 = vmatpush1.msra.mxu0 %v156
    %192 = vmatprep.subr.mxu0 0.0
    %193 = vmatpush1.msra.mxu0 0.0
    %194 = vmatprep.subr.mxu0 0.0
    %195 = vmatpush1.msra.mxu0 0.0
    %196 = vmatprep.subr.mxu0 0.0
    %197 = vmatpush1.msra.mxu0 0.0
    %198 = vmatprep.subr.mxu0 0.0
    %199 = vmatpush1.msra.mxu0 0.0
    %200 = vmatprep.subr.mxu0 0.0
    %201 = vmatpush1.msra.mxu0 0.0
    %202 = vmatprep.subr.mxu0 0.0
    %203 = vmatpush1.msra.mxu0 0.0
    %204 = vmatprep.subr.mxu0 0.0
    %205 = vmatpush1.msra.mxu0 0.0
    %206 = vmatprep.subr.mxu0 0.0
    %207 = vmatpush1.msra.mxu0 0.0
    %208 = vmatprep.subr.mxu0 0.0
    %209 = vmatpush1.msra.mxu0 0.0
    %210 = vmatprep.subr.mxu0 0.0
    %211 = vmatpush1.msra.mxu0 0.0
    %212 = vmatprep.subr.mxu0 0.0
    %213 = vmatpush1.msra.mxu0 0.0
    %214 = vmatprep.subr.mxu0 0.0
    %215 = vmatpush1.msra.mxu0 0.0
    %216 = vmatprep.subr.mxu0 0.0
    %217 = vmatpush1.msra.mxu0 0.0
    %218 = vmatprep.subr.mxu0 0.0
    %219 = vmatpush1.msra.mxu0 0.0
    %220 = vmatprep.subr.mxu0 0.0
    %221 = vmatpush1.msra.mxu0 0.0
    %222 = vmatprep.subr.mxu0 0.0
    %223 = vmatpush1.msra.mxu0 0.0
    %224 = vmatprep.mubr.f32.mxu0 0.0
    %225 = vmatmul.mubr.f32.gmra.mrb[0].mxu0 0.0
    %v226 = vpop.f32.mrb[0].mxu0
    %v227 = vadd.f32 0.0, %v226
    %v228 = vpop.f32.mrb[0].mxu0
    %v229 = vadd.f32 0.0, %v228
    %230 = vdwg.mxu0
    %231 = vmatprep.subr.mxu0 %v99
    %232 = vmatpush1.msra.mxu0 %v98
    %233 = vmatprep.subr.mxu0 %v103
    %234 = vmatpush1.msra.mxu0 %v102
    %235 = vmatprep.subr.mxu0 %v107
    %236 = vmatpush1.msra.mxu0 %v106
    %237 = vmatprep.subr.mxu0 %v111
    %238 = vmatpush1.msra.mxu0 %v110
    %239 = vmatprep.subr.mxu0 %v115
    %240 = vmatpush1.msra.mxu0 %v114
    %241 = vmatprep.subr.mxu0 %v119
    %242 = vmatpush1.msra.mxu0 %v118
    %243 = vmatprep.subr.mxu0 %v123
    %244 = vmatpush1.msra.mxu0 %v122
    %245 = vmatprep.subr.mxu0 %v127
    %246 = vmatpush1.msra.mxu0 %v126
    %247 = vmatprep.subr.mxu0 %v131
    %248 = vmatpush1.msra.mxu0 %v130
    %249 = vmatprep.subr.mxu0 %v135
    %250 = vmatpush1.msra.mxu0 %v134
    %251 = vmatprep.subr.mxu0 %v139
    %252 = vmatpush1.msra.mxu0 %v138
    %253 = vmatprep.subr.mxu0 %v143
    %254 = vmatpush1.msra.mxu0 %v142
    %255 = vmatprep.subr.mxu0 %v147
    %256 = vmatpush1.msra.mxu0 %v146
    %257 = vmatprep.subr.mxu0 %v151
    %258 = vmatpush1.msra.mxu0 %v150
    %259 = vmatprep.subr.mxu0 %v155
    %260 = vmatpush1.msra.mxu0 %v154
    %261 = vmatprep.subr.mxu0 %v159
    %262 = vmatpush1.msra.mxu0 %v158
    %263 = vmatprep.subr.mxu0 0.0
    %264 = vmatpush1.msra.mxu0 0.0
    %265 = vmatprep.subr.mxu0 0.0
    %266 = vmatpush1.msra.mxu0 0.0
    %267 = vmatprep.subr.mxu0 0.0
    %268 = vmatpush1.msra.mxu0 0.0
    %269 = vmatprep.subr.mxu0 0.0
    %270 = vmatpush1.msra.mxu0 0.0
    %271 = vmatprep.subr.mxu0 0.0
    %272 = vmatpush1.msra.mxu0 0.0
    %273 = vmatprep.subr.mxu0 0.0
    %274 = vmatpush1.msra.mxu0 0.0
    %275 = vmatprep.subr.mxu0 0.0
    %276 = vmatpush1.msra.mxu0 0.0
    %277 = vmatprep.subr.mxu0 0.0
    %278 = vmatpush1.msra.mxu0 0.0
    %279 = vmatprep.subr.mxu0 0.0
    %280 = vmatpush1.msra.mxu0 0.0
    %281 = vmatprep.subr.mxu0 0.0
    %282 = vmatpush1.msra.mxu0 0.0
    %283 = vmatprep.subr.mxu0 0.0
    %284 = vmatpush1.msra.mxu0 0.0
    %285 = vmatprep.subr.mxu0 0.0
    %286 = vmatpush1.msra.mxu0 0.0
    %287 = vmatprep.subr.mxu0 0.0
    %288 = vmatpush1.msra.mxu0 0.0
    %289 = vmatprep.subr.mxu0 0.0
    %290 = vmatpush1.msra.mxu0 0.0
    %291 = vmatprep.subr.mxu0 0.0
    %292 = vmatpush1.msra.mxu0 0.0
    %293 = vmatprep.subr.mxu0 0.0
    %294 = vmatpush1.msra.mxu0 0.0
    %295 = vmatprep.mubr.f32.mxu0 0.0
    %296 = vmatmul.mubr.f32.gmra.mrb[0].mxu0 0.0
    %v297 = vpop.f32.mrb[0].mxu0
    %v298 = vadd.f32 0.0, %v297
    %v299 = vpop.f32.mrb[0].mxu0
    %v300 = vadd.f32 0.0, %v299
    %301 = vdwg.mxu0
    %v302 = vadd.f32 %v92, %v227
    %v303 = vadd.f32 %v93, %v229
    %v304 = vadd.f32 %v94, %v298
    %v305 = vadd.f32 %v95, %v300
    %v306 = vtanh.pop %v302
    %v307 = vtanh.pop %v303
    %v308 = vtanh.pop %v304
    %v309 = vtanh.pop %v305
    %v310 = vmul.f32 %v306, 0.5
    %v311 = vmul.f32 %v307, 0.5
    %v312 = vmul.f32 %v308, 0.5
    %v313 = vadd.f32 %v310, 0.5
    %v314 = vadd.f32 %v311, 0.5
    %v315 = vadd.f32 %v312, 0.5
    %v316 = vmul.f32 %v314, 0.0
    %v317 = vmul.f32 %v313, %v309
    %v318 = vadd.f32 %v316, %v317
    %v319 = vtanh.pop %v318
    %v320 = vmul.f32 %v315, %v319
    %s321 = scalar_lea.vmem %s0, 8
    %v322 = vld [vmem:[%s321] sm:$0xff]
    %324 = vset.pattern.permute.xlu0 0
    %325 = vperm.xlu0 %324, %v322
    %v326 = vpop.permute.xlu0 %325
    %v328 = vmul.f32 %v326, %v49
    %v329 = vmul.f32 %v326, %v53
    %v330 = vmul.f32 %v326, %v57
    %v331 = vmul.f32 %v326, %v61
    %v332 = vadd.f32 %v328, %v75
    %v333 = vadd.f32 %v329, %v79
    %v334 = vadd.f32 %v330, %v83
    %v335 = vadd.f32 %v331, %v87
    %336 = vmatprep.subr.mxu0 %v97
    %337 = vmatpush1.msra.mxu0 %v96
    %338 = vmatprep.subr.mxu0 %v101
    %339 = vmatpush1.msra.mxu0 %v100
    %340 = vmatprep.subr.mxu0 %v105
    %341 = vmatpush1.msra.mxu0 %v104
    %342 = vmatprep.subr.mxu0 %v109
    %343 = vmatpush1.msra.mxu0 %v108
    %344 = vmatprep.subr.mxu0 %v113
    %345 = vmatpush1.msra.mxu0 %v112
    %346 = vmatprep.subr.mxu0 %v117
    %347 = vmatpush1.msra.mxu0 %v116
    %348 = vmatprep.subr.mxu0 %v121
    %349 = vmatpush1.msra.mxu0 %v120
    %350 = vmatprep.subr.mxu0 %v125
    %351 = vmatpush1.msra.mxu0 %v124
    %352 = vmatprep.subr.mxu0 %v129
    %353 = vmatpush1.msra.mxu0 %v128
    %354 = vmatprep.subr.mxu0 %v133
    %355 = vmatpush1.msra.mxu0 %v132
    %356 = vmatprep.subr.mxu0 %v137
    %357 = vmatpush1.msra.mxu0 %v136
    %358 = vmatprep.subr.mxu0 %v141
    %359 = vmatpush1.msra.mxu0 %v140
    %360 = vmatprep.subr.mxu0 %v145
    %361 = vmatpush1.msra.mxu0 %v144
    %362 = vmatprep.subr.mxu0 %v149
    %363 = vmatpush1.msra.mxu0 %v148
    %364 = vmatprep.subr.mxu0 %v153
    %365 = vmatpush1.msra.mxu0 %v152
    %366 = vmatprep.subr.mxu0 %v157
    %367 = vmatpush1.msra.mxu0 %v156
    %368 = vmatprep.subr.mxu0 0.0
    %369 = vmatpush1.msra.mxu0 0.0
    %370 = vmatprep.subr.mxu0 0.0
    %371 = vmatpush1.msra.mxu0 0.0
    %372 = vmatprep.subr.mxu0 0.0
    %373 = vmatpush1.msra.mxu0 0.0
    %374 = vmatprep.subr.mxu0 0.0
    %375 = vmatpush1.msra.mxu0 0.0
    %376 = vmatprep.subr.mxu0 0.0
    %377 = vmatpush1.msra.mxu0 0.0
    %378 = vmatprep.subr.mxu0 0.0
    %379 = vmatpush1.msra.mxu0 0.0
    %380 = vmatprep.subr.mxu0 0.0
    %381 = vmatpush1.msra.mxu0 0.0
    %382 = vmatprep.subr.mxu0 0.0
    %383 = vmatpush1.msra.mxu0 0.0
    %384 = vmatprep.subr.mxu0 0.0
    %385 = vmatpush1.msra.mxu0 0.0
    %386 = vmatprep.subr.mxu0 0.0
    %387 = vmatpush1.msra.mxu0 0.0
    %388 = vmatprep.subr.mxu0 0.0
    %389 = vmatpush1.msra.mxu0 0.0
    %390 = vmatprep.subr.mxu0 0.0
    %391 = vmatpush1.msra.mxu0 0.0
    %392 = vmatprep.subr.mxu0 0.0
    %393 = vmatpush1.msra.mxu0 0.0
    %394 = vmatprep.subr.mxu0 0.0
    %395 = vmatpush1.msra.mxu0 0.0
    %396 = vmatprep.subr.mxu0 0.0
    %397 = vmatpush1.msra.mxu0 0.0
    %398 = vmatprep.subr.mxu0 0.0
    %399 = vmatpush1.msra.mxu0 0.0
    %400 = vmatprep.mubr.f32.mxu0 0.0
    %401 = vmatmul.mubr.f32.gmra.mrb[0].mxu0 %v320
    %v402 = vpop.f32.mrb[0].mxu0
    %v403 = vadd.f32 0.0, %v402
    %v404 = vpop.f32.mrb[0].mxu0
    %v405 = vadd.f32 0.0, %v404
    %406 = vdwg.mxu0
    %407 = vmatprep.subr.mxu0 %v99
    %408 = vmatpush1.msra.mxu0 %v98
    %409 = vmatprep.subr.mxu0 %v103
    %410 = vmatpush1.msra.mxu0 %v102
    %411 = vmatprep.subr.mxu0 %v107
    %412 = vmatpush1.msra.mxu0 %v106
    %413 = vmatprep.subr.mxu0 %v111
    %414 = vmatpush1.msra.mxu0 %v110
    %415 = vmatprep.subr.mxu0 %v115
    %416 = vmatpush1.msra.mxu0 %v114
    %417 = vmatprep.subr.mxu0 %v119
    %418 = vmatpush1.msra.mxu0 %v118
    %419 = vmatprep.subr.mxu0 %v123
    %420 = vmatpush1.msra.mxu0 %v122
    %421 = vmatprep.subr.mxu0 %v127
    %422 = vmatpush1.msra.mxu0 %v126
    %423 = vmatprep.subr.mxu0 %v131
    %424 = vmatpush1.msra.mxu0 %v130
    %425 = vmatprep.subr.mxu0 %v135
    %426 = vmatpush1.msra.mxu0 %v134
    %427 = vmatprep.subr.mxu0 %v139
    %428 = vmatpush1.msra.mxu0 %v138
    %429 = vmatprep.subr.mxu0 %v143
    %430 = vmatpush1.msra.mxu0 %v142
    %431 = vmatprep.subr.mxu0 %v147
    %432 = vmatpush1.msra.mxu0 %v146
    %433 = vmatprep.subr.mxu0 %v151
    %434 = vmatpush1.msra.mxu0 %v150
    %435 = vmatprep.subr.mxu0 %v155
    %436 = vmatpush1.msra.mxu0 %v154
    %437 = vmatprep.subr.mxu0 %v159
    %438 = vmatpush1.msra.mxu0 %v158
    %439 = vmatprep.subr.mxu0 0.0
    %440 = vmatpush1.msra.mxu0 0.0
    %441 = vmatprep.subr.mxu0 0.0
    %442 = vmatpush1.msra.mxu0 0.0
    %443 = vmatprep.subr.mxu0 0.0
    %444 = vmatpush1.msra.mxu0 0.0
    %445 = vmatprep.subr.mxu0 0.0
    %446 = vmatpush1.msra.mxu0 0.0
    %447 = vmatprep.subr.mxu0 0.0
    %448 = vmatpush1.msra.mxu0 0.0
    %449 = vmatprep.subr.mxu0 0.0
    %450 = vmatpush1.msra.mxu0 0.0
    %451 = vmatprep.subr.mxu0 0.0
    %452 = vmatpush1.msra.mxu0 0.0
    %453 = vmatprep.subr.mxu0 0.0
    %454 = vmatpush1.msra.mxu0 0.0
    %455 = vmatprep.subr.mxu0 0.0
    %456 = vmatpush1.msra.mxu0 0.0
    %457 = vmatprep.subr.mxu0 0.0
    %458 = vmatpush1.msra.mxu0 0.0
    %459 = vmatprep.subr.mxu0 0.0
    %460 = vmatpush1.msra.mxu0 0.0
    %461 = vmatprep.subr.mxu0 0.0
    %462 = vmatpush1.msra.mxu0 0.0
    %463 = vmatprep.subr.mxu0 0.0
    %464 = vmatpush1.msra.mxu0 0.0
    %465 = vmatprep.subr.mxu0 0.0
    %466 = vmatpush1.msra.mxu0 0.0
    %467 = vmatprep.subr.mxu0 0.0
    %468 = vmatpush1.msra.mxu0 0.0
    %469 = vmatprep.subr.mxu0 0.0
    %470 = vmatpush1.msra.mxu0 0.0
    %471 = vmatprep.mubr.f32.mxu0 0.0
    %472 = vmatmul.mubr.f32.gmra.mrb[0].mxu0 %v320
    %v473 = vpop.f32.mrb[0].mxu0
    %v474 = vadd.f32 0.0, %v473
    %v475 = vpop.f32.mrb[0].mxu0
    %v476 = vadd.f32 0.0, %v475
    %477 = vdwg.mxu0
    %v478 = vadd.f32 %v332, %v403
    %v479 = vadd.f32 %v333, %v405
    %v480 = vadd.f32 %v334, %v474
    %v481 = vadd.f32 %v335, %v476
    %v482 = vtanh.pop %v478
    %v483 = vtanh.pop %v479
    %v484 = vtanh.pop %v480
    %v485 = vtanh.pop %v481
    %v486 = vmul.f32 %v482, 0.5
    %v487 = vmul.f32 %v483, 0.5
    %v488 = vmul.f32 %v484, 0.5
    %v489 = vadd.f32 %v486, 0.5
    %v490 = vadd.f32 %v487, 0.5
    %v491 = vadd.f32 %v488, 0.5
    %v492 = vmul.f32 %v490, %v318
    %v493 = vmul.f32 %v489, %v485
    %v494 = vadd.f32 %v492, %v493
    %v495 = vtanh.pop %v494
    %v496 = vmul.f32 %v491, %v495
    %s497 = scalar_lea.vmem %s0, 16
    %v498 = vld [vmem:[%s497] sm:$0xff]
    %500 = vset.pattern.permute.xlu0 0
    %501 = vperm.xlu0 %500, %v498
    %v502 = vpop.permute.xlu0 %501
    %v504 = vmul.f32 %v502, %v49
    %v505 = vmul.f32 %v502, %v53
    %v506 = vmul.f32 %v502, %v57
    %v507 = vmul.f32 %v502, %v61
    %v508 = vadd.f32 %v504, %v75
    %v509 = vadd.f32 %v505, %v79
    %v510 = vadd.f32 %v506, %v83
    %v511 = vadd.f32 %v507, %v87
    %512 = vmatprep.subr.mxu0 %v97
    %513 = vmatpush1.msra.mxu0 %v96
    %514 = vmatprep.subr.mxu0 %v101
    %515 = vmatpush1.msra.mxu0 %v100
    %516 = vmatprep.subr.mxu0 %v105
    %517 = vmatpush1.msra.mxu0 %v104
    %518 = vmatprep.subr.mxu0 %v109
    %519 = vmatpush1.msra.mxu0 %v108
    %520 = vmatprep.subr.mxu0 %v113
    %521 = vmatpush1.msra.mxu0 %v112
    %522 = vmatprep.subr.mxu0 %v117
    %523 = vmatpush1.msra.mxu0 %v116
    %524 = vmatprep.subr.mxu0 %v121
    %525 = vmatpush1.msra.mxu0 %v120
    %526 = vmatprep.subr.mxu0 %v125
    %527 = vmatpush1.msra.mxu0 %v124
    %528 = vmatprep.subr.mxu0 %v129
    %529 = vmatpush1.msra.mxu0 %v128
    %530 = vmatprep.subr.mxu0 %v133
    %531 = vmatpush1.msra.mxu0 %v132
    %532 = vmatprep.subr.mxu0 %v137
    %533 = vmatpush1.msra.mxu0 %v136
    %534 = vmatprep.subr.mxu0 %v141
    %535 = vmatpush1.msra.mxu0 %v140
    %536 = vmatprep.subr.mxu0 %v145
    %537 = vmatpush1.msra.mxu0 %v144
    %538 = vmatprep.subr.mxu0 %v149
    %539 = vmatpush1.msra.mxu0 %v148
    %540 = vmatprep.subr.mxu0 %v153
    %541 = vmatpush1.msra.mxu0 %v152
    %542 = vmatprep.subr.mxu0 %v157
    %543 = vmatpush1.msra.mxu0 %v156
    %544 = vmatprep.subr.mxu0 0.0
    %545 = vmatpush1.msra.mxu0 0.0
    %546 = vmatprep.subr.mxu0 0.0
    %547 = vmatpush1.msra.mxu0 0.0
    %548 = vmatprep.subr.mxu0 0.0
    %549 = vmatpush1.msra.mxu0 0.0
    %550 = vmatprep.subr.mxu0 0.0
    %551 = vmatpush1.msra.mxu0 0.0
    %552 = vmatprep.subr.mxu0 0.0
    %553 = vmatpush1.msra.mxu0 0.0
    %554 = vmatprep.subr.mxu0 0.0
    %555 = vmatpush1.msra.mxu0 0.0
    %556 = vmatprep.subr.mxu0 0.0
    %557 = vmatpush1.msra.mxu0 0.0
    %558 = vmatprep.subr.mxu0 0.0
    %559 = vmatpush1.msra.mxu0 0.0
    %560 = vmatprep.subr.mxu0 0.0
    %561 = vmatpush1.msra.mxu0 0.0
    %562 = vmatprep.subr.mxu0 0.0
    %563 = vmatpush1.msra.mxu0 0.0
    %564 = vmatprep.subr.mxu0 0.0
    %565 = vmatpush1.msra.mxu0 0.0
    %566 = vmatprep.subr.mxu0 0.0
    %567 = vmatpush1.msra.mxu0 0.0
    %568 = vmatprep.subr.mxu0 0.0
    %569 = vmatpush1.msra.mxu0 0.0
    %570 = vmatprep.subr.mxu0 0.0
    %571 = vmatpush1.msra.mxu0 0.0
    %572 = vmatprep.subr.mxu0 0.0
    %573 = vmatpush1.msra.mxu0 0.0
    %574 = vmatprep.subr.mxu0 0.0
    %575 = vmatpush1.msra.mxu0 0.0
    %576 = vmatprep.mubr.f32.mxu0 0.0
    %577 = vmatmul.mubr.f32.gmra.mrb[0].mxu0 %v496
    %v578 = vpop.f32.mrb[0].mxu0
    %v579 = vadd.f32 0.0, %v578
    %v580 = vpop.f32.mrb[0].mxu0
    %v581 = vadd.f32 0.0, %v580
    %582 = vdwg.mxu0
    %583 = vmatprep.subr.mxu0 %v99
    %584 = vmatpush1.msra.mxu0 %v98
    %585 = vmatprep.subr.mxu0 %v103
    %586 = vmatpush1.msra.mxu0 %v102
    %587 = vmatprep.subr.mxu0 %v107
    %588 = vmatpush1.msra.mxu0 %v106
    %589 = vmatprep.subr.mxu0 %v111
    %590 = vmatpush1.msra.mxu0 %v110
    %591 = vmatprep.subr.mxu0 %v115
    %592 = vmatpush1.msra.mxu0 %v114
    %593 = vmatprep.subr.mxu0 %v119
    %594 = vmatpush1.msra.mxu0 %v118
    %595 = vmatprep.subr.mxu0 %v123
    %596 = vmatpush1.msra.mxu0 %v122
    %597 = vmatprep.subr.mxu0 %v127
    %598 = vmatpush1.msra.mxu0 %v126
    %599 = vmatprep.subr.mxu0 %v131
    %600 = vmatpush1.msra.mxu0 %v130
    %601 = vmatprep.subr.mxu0 %v135
    %602 = vmatpush1.msra.mxu0 %v134
    %603 = vmatprep.subr.mxu0 %v139
    %604 = vmatpush1.msra.mxu0 %v138
    %605 = vmatprep.subr.mxu0 %v143
    %606 = vmatpush1.msra.mxu0 %v142
    %607 = vmatprep.subr.mxu0 %v147
    %608 = vmatpush1.msra.mxu0 %v146
    %609 = vmatprep.subr.mxu0 %v151
    %610 = vmatpush1.msra.mxu0 %v150
    %611 = vmatprep.subr.mxu0 %v155
    %612 = vmatpush1.msra.mxu0 %v154
    %613 = vmatprep.subr.mxu0 %v159
    %614 = vmatpush1.msra.mxu0 %v158
    %615 = vmatprep.subr.mxu0 0.0
    %616 = vmatpush1.msra.mxu0 0.0
    %617 = vmatprep.subr.mxu0 0.0
    %618 = vmatpush1.msra.mxu0 0.0
    %619 = vmatprep.subr.mxu0 0.0
    %620 = vmatpush1.msra.mxu0 0.0
    %621 = vmatprep.subr.mxu0 0.0
    %622 = vmatpush1.msra.mxu0 0.0
    %623 = vmatprep.subr.mxu0 0.0
    %624 = vmatpush1.msra.mxu0 0.0
    %625 = vmatprep.subr.mxu0 0.0
    %626 = vmatpush1.msra.mxu0 0.0
    %627 = vmatprep.subr.mxu0 0.0
    %628 = vmatpush1.msra.mxu0 0.0
    %629 = vmatprep.subr.mxu0 0.0
    %630 = vmatpush1.msra.mxu0 0.0
    %631 = vmatprep.subr.mxu0 0.0
    %632 = vmatpush1.msra.mxu0 0.0
    %633 = vmatprep.subr.mxu0 0.0
    %634 = vmatpush1.msra.mxu0 0.0
    %635 = vmatprep.subr.mxu0 0.0
    %636 = vmatpush1.msra.mxu0 0.0
    %637 = vmatprep.subr.mxu0 0.0
    %638 = vmatpush1.msra.mxu0 0.0
    %639 = vmatprep.subr.mxu0 0.0
    %640 = vmatpush1.msra.mxu0 0.0
    %641 = vmatprep.subr.mxu0 0.0
    %642 = vmatpush1.msra.mxu0 0.0
    %643 = vmatprep.subr.mxu0 0.0
    %644 = vmatpush1.msra.mxu0 0.0
    %645 = vmatprep.subr.mxu0 0.0
    %646 = vmatpush1.msra.mxu0 0.0
    %647 = vmatprep.mubr.f32.mxu0 0.0
    %648 = vmatmul.mubr.f32.gmra.mrb[0].mxu0 %v496
    %v649 = vpop.f32.mrb[0].mxu0
    %v650 = vadd.f32 0.0, %v649
    %v651 = vpop.f32.mrb[0].mxu0
    %v652 = vadd.f32 0.0, %v651
    %653 = vdwg.mxu0
    %v654 = vadd.f32 %v508, %v579
    %v655 = vadd.f32 %v509, %v581
    %v656 = vadd.f32 %v510, %v650
    %v657 = vadd.f32 %v511, %v652
    %v658 = vtanh.pop %v654
    %v659 = vtanh.pop %v655
    %v660 = vtanh.pop %v656
    %v661 = vtanh.pop %v657
    %v662 = vmul.f32 %v658, 0.5
    %v663 = vmul.f32 %v659, 0.5
    %v664 = vmul.f32 %v660, 0.5
    %v665 = vadd.f32 %v662, 0.5
    %v666 = vadd.f32 %v663, 0.5
    %v667 = vadd.f32 %v664, 0.5
    %v668 = vmul.f32 %v666, %v494
    %v669 = vmul.f32 %v665, %v661
    %v670 = vadd.f32 %v668, %v669
    %v671 = vtanh.pop %v670
    %v672 = vmul.f32 %v667, %v671
    %s673 = scalar_lea.vmem %s0, 24
    %v674 = vld [vmem:[%s673] sm:$0xff]
    %676 = vset.pattern.permute.xlu0 0
    %677 = vperm.xlu0 %676, %v674
    %v678 = vpop.permute.xlu0 %677
    %v680 = vmul.f32 %v678, %v49
    %v681 = vmul.f32 %v678, %v53
    %v682 = vmul.f32 %v678, %v57
    %v683 = vmul.f32 %v678, %v61
    %v684 = vadd.f32 %v680, %v75
    %v685 = vadd.f32 %v681, %v79
    %v686 = vadd.f32 %v682, %v83
    %v687 = vadd.f32 %v683, %v87
    %688 = vmatprep.subr.mxu0 %v97
    %689 = vmatpush1.msra.mxu0 %v96
    %690 = vmatprep.subr.mxu0 %v101
    %691 = vmatpush1.msra.mxu0 %v100
    %692 = vmatprep.subr.mxu0 %v105
    %693 = vmatpush1.msra.mxu0 %v104
    %694 = vmatprep.subr.mxu0 %v109
    %695 = vmatpush1.msra.mxu0 %v108
    %696 = vmatprep.subr.mxu0 %v113
    %697 = vmatpush1.msra.mxu0 %v112
    %698 = vmatprep.subr.mxu0 %v117
    %699 = vmatpush1.msra.mxu0 %v116
    %700 = vmatprep.subr.mxu0 %v121
    %701 = vmatpush1.msra.mxu0 %v120
    %702 = vmatprep.subr.mxu0 %v125
    %703 = vmatpush1.msra.mxu0 %v124
    %704 = vmatprep.subr.mxu0 %v129
    %705 = vmatpush1.msra.mxu0 %v128
    %706 = vmatprep.subr.mxu0 %v133
    %707 = vmatpush1.msra.mxu0 %v132
    %708 = vmatprep.subr.mxu0 %v137
    %709 = vmatpush1.msra.mxu0 %v136
    %710 = vmatprep.subr.mxu0 %v141
    %711 = vmatpush1.msra.mxu0 %v140
    %712 = vmatprep.subr.mxu0 %v145
    %713 = vmatpush1.msra.mxu0 %v144
    %714 = vmatprep.subr.mxu0 %v149
    %715 = vmatpush1.msra.mxu0 %v148
    %716 = vmatprep.subr.mxu0 %v153
    %717 = vmatpush1.msra.mxu0 %v152
    %718 = vmatprep.subr.mxu0 %v157
    %719 = vmatpush1.msra.mxu0 %v156
    %720 = vmatprep.subr.mxu0 0.0
    %721 = vmatpush1.msra.mxu0 0.0
    %722 = vmatprep.subr.mxu0 0.0
    %723 = vmatpush1.msra.mxu0 0.0
    %724 = vmatprep.subr.mxu0 0.0
    %725 = vmatpush1.msra.mxu0 0.0
    %726 = vmatprep.subr.mxu0 0.0
    %727 = vmatpush1.msra.mxu0 0.0
    %728 = vmatprep.subr.mxu0 0.0
    %729 = vmatpush1.msra.mxu0 0.0
    %730 = vmatprep.subr.mxu0 0.0
    %731 = vmatpush1.msra.mxu0 0.0
    %732 = vmatprep.subr.mxu0 0.0
    %733 = vmatpush1.msra.mxu0 0.0
    %734 = vmatprep.subr.mxu0 0.0
    %735 = vmatpush1.msra.mxu0 0.0
    %736 = vmatprep.subr.mxu0 0.0
    %737 = vmatpush1.msra.mxu0 0.0
    %738 = vmatprep.subr.mxu0 0.0
    %739 = vmatpush1.msra.mxu0 0.0
    %740 = vmatprep.subr.mxu0 0.0
    %741 = vmatpush1.msra.mxu0 0.0
    %742 = vmatprep.subr.mxu0 0.0
    %743 = vmatpush1.msra.mxu0 0.0
    %744 = vmatprep.subr.mxu0 0.0
    %745 = vmatpush1.msra.mxu0 0.0
    %746 = vmatprep.subr.mxu0 0.0
    %747 = vmatpush1.msra.mxu0 0.0
    %748 = vmatprep.subr.mxu0 0.0
    %749 = vmatpush1.msra.mxu0 0.0
    %750 = vmatprep.subr.mxu0 0.0
    %751 = vmatpush1.msra.mxu0 0.0
    %752 = vmatprep.mubr.f32.mxu0 0.0
    %753 = vmatmul.mubr.f32.gmra.mrb[0].mxu0 %v672
    %v754 = vpop.f32.mrb[0].mxu0
    %v755 = vadd.f32 0.0, %v754
    %v756 = vpop.f32.mrb[0].mxu0
    %v757 = vadd.f32 0.0, %v756
    %758 = vdwg.mxu0
    %759 = vmatprep.subr.mxu0 %v99
    %760 = vmatpush1.msra.mxu0 %v98
    %761 = vmatprep.subr.mxu0 %v103
    %762 = vmatpush1.msra.mxu0 %v102
    %763 = vmatprep.subr.mxu0 %v107
    %764 = vmatpush1.msra.mxu0 %v106
    %765 = vmatprep.subr.mxu0 %v111
    %766 = vmatpush1.msra.mxu0 %v110
    %767 = vmatprep.subr.mxu0 %v115
    %768 = vmatpush1.msra.mxu0 %v114
    %769 = vmatprep.subr.mxu0 %v119
    %770 = vmatpush1.msra.mxu0 %v118
    %771 = vmatprep.subr.mxu0 %v123
    %772 = vmatpush1.msra.mxu0 %v122
    %773 = vmatprep.subr.mxu0 %v127
    %774 = vmatpush1.msra.mxu0 %v126
    %775 = vmatprep.subr.mxu0 %v131
    %776 = vmatpush1.msra.mxu0 %v130
    %777 = vmatprep.subr.mxu0 %v135
    %778 = vmatpush1.msra.mxu0 %v134
    %779 = vmatprep.subr.mxu0 %v139
    %780 = vmatpush1.msra.mxu0 %v138
    %781 = vmatprep.subr.mxu0 %v143
    %782 = vmatpush1.msra.mxu0 %v142
    %783 = vmatprep.subr.mxu0 %v147
    %784 = vmatpush1.msra.mxu0 %v146
    %785 = vmatprep.subr.mxu0 %v151
    %786 = vmatpush1.msra.mxu0 %v150
    %787 = vmatprep.subr.mxu0 %v155
    %788 = vmatpush1.msra.mxu0 %v154
    %789 = vmatprep.subr.mxu0 %v159
    %790 = vmatpush1.msra.mxu0 %v158
    %791 = vmatprep.subr.mxu0 0.0
    %792 = vmatpush1.msra.mxu0 0.0
    %793 = vmatprep.subr.mxu0 0.0
    %794 = vmatpush1.msra.mxu0 0.0
    %795 = vmatprep.subr.mxu0 0.0
    %796 = vmatpush1.msra.mxu0 0.0
    %797 = vmatprep.subr.mxu0 0.0
    %798 = vmatpush1.msra.mxu0 0.0
    %799 = vmatprep.subr.mxu0 0.0
    %800 = vmatpush1.msra.mxu0 0.0
    %801 = vmatprep.subr.mxu0 0.0
    %802 = vmatpush1.msra.mxu0 0.0
    %803 = vmatprep.subr.mxu0 0.0
    %804 = vmatpush1.msra.mxu0 0.0
    %805 = vmatprep.subr.mxu0 0.0
    %806 = vmatpush1.msra.mxu0 0.0
    %807 = vmatprep.subr.mxu0 0.0
    %808 = vmatpush1.msra.mxu0 0.0
    %809 = vmatprep.subr.mxu0 0.0
    %810 = vmatpush1.msra.mxu0 0.0
    %811 = vmatprep.subr.mxu0 0.0
    %812 = vmatpush1.msra.mxu0 0.0
    %813 = vmatprep.subr.mxu0 0.0
    %814 = vmatpush1.msra.mxu0 0.0
    %815 = vmatprep.subr.mxu0 0.0
    %816 = vmatpush1.msra.mxu0 0.0
    %817 = vmatprep.subr.mxu0 0.0
    %818 = vmatpush1.msra.mxu0 0.0
    %819 = vmatprep.subr.mxu0 0.0
    %820 = vmatpush1.msra.mxu0 0.0
    %821 = vmatprep.subr.mxu0 0.0
    %822 = vmatpush1.msra.mxu0 0.0
    %823 = vmatprep.mubr.f32.mxu0 0.0
    %824 = vmatmul.mubr.f32.gmra.mrb[0].mxu0 %v672
    %v825 = vpop.f32.mrb[0].mxu0
    %v826 = vadd.f32 0.0, %v825
    %v827 = vpop.f32.mrb[0].mxu0
    %v828 = vadd.f32 0.0, %v827
    %829 = vdwg.mxu0
    %v830 = vadd.f32 %v684, %v755
    %v831 = vadd.f32 %v685, %v757
    %v832 = vadd.f32 %v686, %v826
    %v833 = vadd.f32 %v687, %v828
    %v834 = vtanh.pop %v830
    %v835 = vtanh.pop %v831
    %v836 = vtanh.pop %v832
    %v837 = vtanh.pop %v833
    %v838 = vmul.f32 %v834, 0.5
    %v839 = vmul.f32 %v835, 0.5
    %v840 = vmul.f32 %v836, 0.5
    %v841 = vadd.f32 %v838, 0.5
    %v842 = vadd.f32 %v839, 0.5
    %v843 = vadd.f32 %v840, 0.5
    %v844 = vmul.f32 %v842, %v670
    %v845 = vmul.f32 %v841, %v837
    %v846 = vadd.f32 %v844, %v845
    %v847 = vtanh.pop %v846
    %v848 = vmul.f32 %v843, %v847
    %s849 = scalar_lea.vmem %s0, 32
    %v850 = vld [vmem:[%s849] sm:$0xff]
    %852 = vset.pattern.permute.xlu0 0
    %853 = vperm.xlu0 %852, %v850
    %v854 = vpop.permute.xlu0 %853
    %v856 = vmul.f32 %v854, %v49
    %v857 = vmul.f32 %v854, %v53
    %v858 = vmul.f32 %v854, %v57
    %v859 = vmul.f32 %v854, %v61
    %v860 = vadd.f32 %v856, %v75
    %v861 = vadd.f32 %v857, %v79
    %v862 = vadd.f32 %v858, %v83
    %v863 = vadd.f32 %v859, %v87
    %864 = vmatprep.subr.mxu0 %v97
    %865 = vmatpush1.msra.mxu0 %v96
    %866 = vmatprep.subr.mxu0 %v101
    %867 = vmatpush1.msra.mxu0 %v100
    %868 = vmatprep.subr.mxu0 %v105
    %869 = vmatpush1.msra.mxu0 %v104
    %870 = vmatprep.subr.mxu0 %v109
    %871 = vmatpush1.msra.mxu0 %v108
    %872 = vmatprep.subr.mxu0 %v113
    %873 = vmatpush1.msra.mxu0 %v112
    %874 = vmatprep.subr.mxu0 %v117
    %875 = vmatpush1.msra.mxu0 %v116
    %876 = vmatprep.subr.mxu0 %v121
    %877 = vmatpush1.msra.mxu0 %v120
    %878 = vmatprep.subr.mxu0 %v125
    %879 = vmatpush1.msra.mxu0 %v124
    %880 = vmatprep.subr.mxu0 %v129
    %881 = vmatpush1.msra.mxu0 %v128
    %882 = vmatprep.subr.mxu0 %v133
    %883 = vmatpush1.msra.mxu0 %v132
    %884 = vmatprep.subr.mxu0 %v137
    %885 = vmatpush1.msra.mxu0 %v136
    %886 = vmatprep.subr.mxu0 %v141
    %887 = vmatpush1.msra.mxu0 %v140
    %888 = vmatprep.subr.mxu0 %v145
    %889 = vmatpush1.msra.mxu0 %v144
    %890 = vmatprep.subr.mxu0 %v149
    %891 = vmatpush1.msra.mxu0 %v148
    %892 = vmatprep.subr.mxu0 %v153
    %893 = vmatpush1.msra.mxu0 %v152
    %894 = vmatprep.subr.mxu0 %v157
    %895 = vmatpush1.msra.mxu0 %v156
    %896 = vmatprep.subr.mxu0 0.0
    %897 = vmatpush1.msra.mxu0 0.0
    %898 = vmatprep.subr.mxu0 0.0
    %899 = vmatpush1.msra.mxu0 0.0
    %900 = vmatprep.subr.mxu0 0.0
    %901 = vmatpush1.msra.mxu0 0.0
    %902 = vmatprep.subr.mxu0 0.0
    %903 = vmatpush1.msra.mxu0 0.0
    %904 = vmatprep.subr.mxu0 0.0
    %905 = vmatpush1.msra.mxu0 0.0
    %906 = vmatprep.subr.mxu0 0.0
    %907 = vmatpush1.msra.mxu0 0.0
    %908 = vmatprep.subr.mxu0 0.0
    %909 = vmatpush1.msra.mxu0 0.0
    %910 = vmatprep.subr.mxu0 0.0
    %911 = vmatpush1.msra.mxu0 0.0
    %912 = vmatprep.subr.mxu0 0.0
    %913 = vmatpush1.msra.mxu0 0.0
    %914 = vmatprep.subr.mxu0 0.0
    %915 = vmatpush1.msra.mxu0 0.0
    %916 = vmatprep.subr.mxu0 0.0
    %917 = vmatpush1.msra.mxu0 0.0
    %918 = vmatprep.subr.mxu0 0.0
    %919 = vmatpush1.msra.mxu0 0.0
    %920 = vmatprep.subr.mxu0 0.0
    %921 = vmatpush1.msra.mxu0 0.0
    %922 = vmatprep.subr.mxu0 0.0
    %923 = vmatpush1.msra.mxu0 0.0
    %924 = vmatprep.subr.mxu0 0.0
    %925 = vmatpush1.msra.mxu0 0.0
    %926 = vmatprep.subr.mxu0 0.0
    %927 = vmatpush1.msra.mxu0 0.0
    %928 = vmatprep.mubr.f32.mxu0 0.0
    %929 = vmatmul.mubr.f32.gmra.mrb[0].mxu0 %v848
    %v930 = vpop.f32.mrb[0].mxu0
    %v931 = vadd.f32 0.0, %v930
    %v932 = vpop.f32.mrb[0].mxu0
    %v933 = vadd.f32 0.0, %v932
    %934 = vdwg.mxu0
    %935 = vmatprep.subr.mxu0 %v99
    %936 = vmatpush1.msra.mxu0 %v98
    %937 = vmatprep.subr.mxu0 %v103
    %938 = vmatpush1.msra.mxu0 %v102
    %939 = vmatprep.subr.mxu0 %v107
    %940 = vmatpush1.msra.mxu0 %v106
    %941 = vmatprep.subr.mxu0 %v111
    %942 = vmatpush1.msra.mxu0 %v110
    %943 = vmatprep.subr.mxu0 %v115
    %944 = vmatpush1.msra.mxu0 %v114
    %945 = vmatprep.subr.mxu0 %v119
    %946 = vmatpush1.msra.mxu0 %v118
    %947 = vmatprep.subr.mxu0 %v123
    %948 = vmatpush1.msra.mxu0 %v122
    %949 = vmatprep.subr.mxu0 %v127
    %950 = vmatpush1.msra.mxu0 %v126
    %951 = vmatprep.subr.mxu0 %v131
    %952 = vmatpush1.msra.mxu0 %v130
    %953 = vmatprep.subr.mxu0 %v135
    %954 = vmatpush1.msra.mxu0 %v134
    %955 = vmatprep.subr.mxu0 %v139
    %956 = vmatpush1.msra.mxu0 %v138
    %957 = vmatprep.subr.mxu0 %v143
    %958 = vmatpush1.msra.mxu0 %v142
    %959 = vmatprep.subr.mxu0 %v147
    %960 = vmatpush1.msra.mxu0 %v146
    %961 = vmatprep.subr.mxu0 %v151
    %962 = vmatpush1.msra.mxu0 %v150
    %963 = vmatprep.subr.mxu0 %v155
    %964 = vmatpush1.msra.mxu0 %v154
    %965 = vmatprep.subr.mxu0 %v159
    %966 = vmatpush1.msra.mxu0 %v158
    %967 = vmatprep.subr.mxu0 0.0
    %968 = vmatpush1.msra.mxu0 0.0
    %969 = vmatprep.subr.mxu0 0.0
    %970 = vmatpush1.msra.mxu0 0.0
    %971 = vmatprep.subr.mxu0 0.0
    %972 = vmatpush1.msra.mxu0 0.0
    %973 = vmatprep.subr.mxu0 0.0
    %974 = vmatpush1.msra.mxu0 0.0
    %975 = vmatprep.subr.mxu0 0.0
    %976 = vmatpush1.msra.mxu0 0.0
    %977 = vmatprep.subr.mxu0 0.0
    %978 = vmatpush1.msra.mxu0 0.0
    %979 = vmatprep.subr.mxu0 0.0
    %980 = vmatpush1.msra.mxu0 0.0
    %981 = vmatprep.subr.mxu0 0.0
    %982 = vmatpush1.msra.mxu0 0.0
    %983 = vmatprep.subr.mxu0 0.0
    %984 = vmatpush1.msra.mxu0 0.0
    %985 = vmatprep.subr.mxu0 0.0
    %986 = vmatpush1.msra.mxu0 0.0
    %987 = vmatprep.subr.mxu0 0.0
    %988 = vmatpush1.msra.mxu0 0.0
    %989 = vmatprep.subr.mxu0 0.0
    %990 = vmatpush1.msra.mxu0 0.0
    %991 = vmatprep.subr.mxu0 0.0
    %992 = vmatpush1.msra.mxu0 0.0
    %993 = vmatprep.subr.mxu0 0.0
    %994 = vmatpush1.msra.mxu0 0.0
    %995 = vmatprep.subr.mxu0 0.0
    %996 = vmatpush1.msra.mxu0 0.0
    %997 = vmatprep.subr.mxu0 0.0
    %998 = vmatpush1.msra.mxu0 0.0
    %999 = vmatprep.mubr.f32.mxu0 0.0
    %1000 = vmatmul.mubr.f32.gmra.mrb[0].mxu0 %v848
    %v1001 = vpop.f32.mrb[0].mxu0
    %v1002 = vadd.f32 0.0, %v1001
    %v1003 = vpop.f32.mrb[0].mxu0
    %v1004 = vadd.f32 0.0, %v1003
    %1005 = vdwg.mxu0
    %v1006 = vadd.f32 %v860, %v931
    %v1007 = vadd.f32 %v861, %v933
    %v1008 = vadd.f32 %v862, %v1002
    %v1009 = vadd.f32 %v863, %v1004
    %v1010 = vtanh.pop %v1006
    %v1011 = vtanh.pop %v1007
    %v1012 = vtanh.pop %v1008
    %v1013 = vtanh.pop %v1009
    %v1014 = vmul.f32 %v1010, 0.5
    %v1015 = vmul.f32 %v1011, 0.5
    %v1016 = vmul.f32 %v1012, 0.5
    %v1017 = vadd.f32 %v1014, 0.5
    %v1018 = vadd.f32 %v1015, 0.5
    %v1019 = vadd.f32 %v1016, 0.5
    %v1020 = vmul.f32 %v1018, %v846
    %v1021 = vmul.f32 %v1017, %v1013
    %v1022 = vadd.f32 %v1020, %v1021
    %v1023 = vtanh.pop %v1022
    %v1024 = vmul.f32 %v1019, %v1023
    %s1025 = scalar_lea.vmem %s0, 40
    %v1026 = vld [vmem:[%s1025] sm:$0xff]
    %1028 = vset.pattern.permute.xlu0 0
    %1029 = vperm.xlu0 %1028, %v1026
    %v1030 = vpop.permute.xlu0 %1029
    %v1032 = vmul.f32 %v1030, %v49
    %v1033 = vmul.f32 %v1030, %v53
    %v1034 = vmul.f32 %v1030, %v57
    %v1035 = vmul.f32 %v1030, %v61
    %v1036 = vadd.f32 %v1032, %v75
    %v1037 = vadd.f32 %v1033, %v79
    %v1038 = vadd.f32 %v1034, %v83
    %v1039 = vadd.f32 %v1035, %v87
    %1040 = vmatprep.subr.mxu0 %v97
    %1041 = vmatpush1.msra.mxu0 %v96
    %1042 = vmatprep.subr.mxu0 %v101
    %1043 = vmatpush1.msra.mxu0 %v100
    %1044 = vmatprep.subr.mxu0 %v105
    %1045 = vmatpush1.msra.mxu0 %v104
    %1046 = vmatprep.subr.mxu0 %v109
    %1047 = vmatpush1.msra.mxu0 %v108
    %1048 = vmatprep.subr.mxu0 %v113
    %1049 = vmatpush1.msra.mxu0 %v112
    %1050 = vmatprep.subr.mxu0 %v117
    %1051 = vmatpush1.msra.mxu0 %v116
    %1052 = vmatprep.subr.mxu0 %v121
    %1053 = vmatpush1.msra.mxu0 %v120
    %1054 = vmatprep.subr.mxu0 %v125
    %1055 = vmatpush1.msra.mxu0 %v124
    %1056 = vmatprep.subr.mxu0 %v129
    %1057 = vmatpush1.msra.mxu0 %v128
    %1058 = vmatprep.subr.mxu0 %v133
    %1059 = vmatpush1.msra.mxu0 %v132
    %1060 = vmatprep.subr.mxu0 %v137
    %1061 = vmatpush1.msra.mxu0 %v136
    %1062 = vmatprep.subr.mxu0 %v141
    %1063 = vmatpush1.msra.mxu0 %v140
    %1064 = vmatprep.subr.mxu0 %v145
    %1065 = vmatpush1.msra.mxu0 %v144
    %1066 = vmatprep.subr.mxu0 %v149
    %1067 = vmatpush1.msra.mxu0 %v148
    %1068 = vmatprep.subr.mxu0 %v153
    %1069 = vmatpush1.msra.mxu0 %v152
    %1070 = vmatprep.subr.mxu0 %v157
    %1071 = vmatpush1.msra.mxu0 %v156
    %1072 = vmatprep.subr.mxu0 0.0
    %1073 = vmatpush1.msra.mxu0 0.0
    %1074 = vmatprep.subr.mxu0 0.0
    %1075 = vmatpush1.msra.mxu0 0.0
    %1076 = vmatprep.subr.mxu0 0.0
    %1077 = vmatpush1.msra.mxu0 0.0
    %1078 = vmatprep.subr.mxu0 0.0
    %1079 = vmatpush1.msra.mxu0 0.0
    %1080 = vmatprep.subr.mxu0 0.0
    %1081 = vmatpush1.msra.mxu0 0.0
    %1082 = vmatprep.subr.mxu0 0.0
    %1083 = vmatpush1.msra.mxu0 0.0
    %1084 = vmatprep.subr.mxu0 0.0
    %1085 = vmatpush1.msra.mxu0 0.0
    %1086 = vmatprep.subr.mxu0 0.0
    %1087 = vmatpush1.msra.mxu0 0.0
    %1088 = vmatprep.subr.mxu0 0.0
    %1089 = vmatpush1.msra.mxu0 0.0
    %1090 = vmatprep.subr.mxu0 0.0
    %1091 = vmatpush1.msra.mxu0 0.0
    %1092 = vmatprep.subr.mxu0 0.0
    %1093 = vmatpush1.msra.mxu0 0.0
    %1094 = vmatprep.subr.mxu0 0.0
    %1095 = vmatpush1.msra.mxu0 0.0
    %1096 = vmatprep.subr.mxu0 0.0
    %1097 = vmatpush1.msra.mxu0 0.0
    %1098 = vmatprep.subr.mxu0 0.0
    %1099 = vmatpush1.msra.mxu0 0.0
    %1100 = vmatprep.subr.mxu0 0.0
    %1101 = vmatpush1.msra.mxu0 0.0
    %1102 = vmatprep.subr.mxu0 0.0
    %1103 = vmatpush1.msra.mxu0 0.0
    %1104 = vmatprep.mubr.f32.mxu0 0.0
    %1105 = vmatmul.mubr.f32.gmra.mrb[0].mxu0 %v1024
    %v1106 = vpop.f32.mrb[0].mxu0
    %v1107 = vadd.f32 0.0, %v1106
    %v1108 = vpop.f32.mrb[0].mxu0
    %v1109 = vadd.f32 0.0, %v1108
    %1110 = vdwg.mxu0
    %1111 = vmatprep.subr.mxu0 %v99
    %1112 = vmatpush1.msra.mxu0 %v98
    %1113 = vmatprep.subr.mxu0 %v103
    %1114 = vmatpush1.msra.mxu0 %v102
    %1115 = vmatprep.subr.mxu0 %v107
    %1116 = vmatpush1.msra.mxu0 %v106
    %1117 = vmatprep.subr.mxu0 %v111
    %1118 = vmatpush1.msra.mxu0 %v110
    %1119 = vmatprep.subr.mxu0 %v115
    %1120 = vmatpush1.msra.mxu0 %v114
    %1121 = vmatprep.subr.mxu0 %v119
    %1122 = vmatpush1.msra.mxu0 %v118
    %1123 = vmatprep.subr.mxu0 %v123
    %1124 = vmatpush1.msra.mxu0 %v122
    %1125 = vmatprep.subr.mxu0 %v127
    %1126 = vmatpush1.msra.mxu0 %v126
    %1127 = vmatprep.subr.mxu0 %v131
    %1128 = vmatpush1.msra.mxu0 %v130
    %1129 = vmatprep.subr.mxu0 %v135
    %1130 = vmatpush1.msra.mxu0 %v134
    %1131 = vmatprep.subr.mxu0 %v139
    %1132 = vmatpush1.msra.mxu0 %v138
    %1133 = vmatprep.subr.mxu0 %v143
    %1134 = vmatpush1.msra.mxu0 %v142
    %1135 = vmatprep.subr.mxu0 %v147
    %1136 = vmatpush1.msra.mxu0 %v146
    %1137 = vmatprep.subr.mxu0 %v151
    %1138 = vmatpush1.msra.mxu0 %v150
    %1139 = vmatprep.subr.mxu0 %v155
    %1140 = vmatpush1.msra.mxu0 %v154
    %1141 = vmatprep.subr.mxu0 %v159
    %1142 = vmatpush1.msra.mxu0 %v158
    %1143 = vmatprep.subr.mxu0 0.0
    %1144 = vmatpush1.msra.mxu0 0.0
    %1145 = vmatprep.subr.mxu0 0.0
    %1146 = vmatpush1.msra.mxu0 0.0
    %1147 = vmatprep.subr.mxu0 0.0
    %1148 = vmatpush1.msra.mxu0 0.0
    %1149 = vmatprep.subr.mxu0 0.0
    %1150 = vmatpush1.msra.mxu0 0.0
    %1151 = vmatprep.subr.mxu0 0.0
    %1152 = vmatpush1.msra.mxu0 0.0
    %1153 = vmatprep.subr.mxu0 0.0
    %1154 = vmatpush1.msra.mxu0 0.0
    %1155 = vmatprep.subr.mxu0 0.0
    %1156 = vmatpush1.msra.mxu0 0.0
    %1157 = vmatprep.subr.mxu0 0.0
    %1158 = vmatpush1.msra.mxu0 0.0
    %1159 = vmatprep.subr.mxu0 0.0
    %1160 = vmatpush1.msra.mxu0 0.0
    %1161 = vmatprep.subr.mxu0 0.0
    %1162 = vmatpush1.msra.mxu0 0.0
    %1163 = vmatprep.subr.mxu0 0.0
    %1164 = vmatpush1.msra.mxu0 0.0
    %1165 = vmatprep.subr.mxu0 0.0
    %1166 = vmatpush1.msra.mxu0 0.0
    %1167 = vmatprep.subr.mxu0 0.0
    %1168 = vmatpush1.msra.mxu0 0.0
    %1169 = vmatprep.subr.mxu0 0.0
    %1170 = vmatpush1.msra.mxu0 0.0
    %1171 = vmatprep.subr.mxu0 0.0
    %1172 = vmatpush1.msra.mxu0 0.0
    %1173 = vmatprep.subr.mxu0 0.0
    %1174 = vmatpush1.msra.mxu0 0.0
    %1175 = vmatprep.mubr.f32.mxu0 0.0
    %1176 = vmatmul.mubr.f32.gmra.mrb[0].mxu0 %v1024
    %v1177 = vpop.f32.mrb[0].mxu0
    %v1178 = vadd.f32 0.0, %v1177
    %v1179 = vpop.f32.mrb[0].mxu0
    %v1180 = vadd.f32 0.0, %v1179
    %1181 = vdwg.mxu0
    %v1182 = vadd.f32 %v1036, %v1107
    %v1183 = vadd.f32 %v1037, %v1109
    %v1184 = vadd.f32 %v1038, %v1178
    %v1185 = vadd.f32 %v1039, %v1180
    %v1186 = vtanh.pop %v1182
    %v1187 = vtanh.pop %v1183
    %v1188 = vtanh.pop %v1184
    %v1189 = vtanh.pop %v1185
    %v1190 = vmul.f32 %v1186, 0.5
    %v1191 = vmul.f32 %v1187, 0.5
    %v1192 = vmul.f32 %v1188, 0.5
    %v1193 = vadd.f32 %v1190, 0.5
    %v1194 = vadd.f32 %v1191, 0.5
    %v1195 = vadd.f32 %v1192, 0.5
    %v1196 = vmul.f32 %v1194, %v1022
    %v1197 = vmul.f32 %v1193, %v1189
    %v1198 = vadd.f32 %v1196, %v1197
    %v1199 = vtanh.pop %v1198
    %v1200 = vmul.f32 %v1195, %v1199
    %s1201 = scalar_lea.vmem %s0, 48
    %v1202 = vld [vmem:[%s1201] sm:$0xff]
    %1204 = vset.pattern.permute.xlu0 0
    %1205 = vperm.xlu0 %1204, %v1202
    %v1206 = vpop.permute.xlu0 %1205
    %v1208 = vmul.f32 %v1206, %v49
    %v1209 = vmul.f32 %v1206, %v53
    %v1210 = vmul.f32 %v1206, %v57
    %v1211 = vmul.f32 %v1206, %v61
    %v1212 = vadd.f32 %v1208, %v75
    %v1213 = vadd.f32 %v1209, %v79
    %v1214 = vadd.f32 %v1210, %v83
    %v1215 = vadd.f32 %v1211, %v87
    %1216 = vmatprep.subr.mxu0 %v97
    %1217 = vmatpush1.msra.mxu0 %v96
    %1218 = vmatprep.subr.mxu0 %v101
    %1219 = vmatpush1.msra.mxu0 %v100
    %1220 = vmatprep.subr.mxu0 %v105
    %1221 = vmatpush1.msra.mxu0 %v104
    %1222 = vmatprep.subr.mxu0 %v109
    %1223 = vmatpush1.msra.mxu0 %v108
    %1224 = vmatprep.subr.mxu0 %v113
    %1225 = vmatpush1.msra.mxu0 %v112
    %1226 = vmatprep.subr.mxu0 %v117
    %1227 = vmatpush1.msra.mxu0 %v116
    %1228 = vmatprep.subr.mxu0 %v121
    %1229 = vmatpush1.msra.mxu0 %v120
    %1230 = vmatprep.subr.mxu0 %v125
    %1231 = vmatpush1.msra.mxu0 %v124
    %1232 = vmatprep.subr.mxu0 %v129
    %1233 = vmatpush1.msra.mxu0 %v128
    %1234 = vmatprep.subr.mxu0 %v133
    %1235 = vmatpush1.msra.mxu0 %v132
    %1236 = vmatprep.subr.mxu0 %v137
    %1237 = vmatpush1.msra.mxu0 %v136
    %1238 = vmatprep.subr.mxu0 %v141
    %1239 = vmatpush1.msra.mxu0 %v140
    %1240 = vmatprep.subr.mxu0 %v145
    %1241 = vmatpush1.msra.mxu0 %v144
    %1242 = vmatprep.subr.mxu0 %v149
    %1243 = vmatpush1.msra.mxu0 %v148
    %1244 = vmatprep.subr.mxu0 %v153
    %1245 = vmatpush1.msra.mxu0 %v152
    %1246 = vmatprep.subr.mxu0 %v157
    %1247 = vmatpush1.msra.mxu0 %v156
    %1248 = vmatprep.subr.mxu0 0.0
    %1249 = vmatpush1.msra.mxu0 0.0
    %1250 = vmatprep.subr.mxu0 0.0
    %1251 = vmatpush1.msra.mxu0 0.0
    %1252 = vmatprep.subr.mxu0 0.0
    %1253 = vmatpush1.msra.mxu0 0.0
    %1254 = vmatprep.subr.mxu0 0.0
    %1255 = vmatpush1.msra.mxu0 0.0
    %1256 = vmatprep.subr.mxu0 0.0
    %1257 = vmatpush1.msra.mxu0 0.0
    %1258 = vmatprep.subr.mxu0 0.0
    %1259 = vmatpush1.msra.mxu0 0.0
    %1260 = vmatprep.subr.mxu0 0.0
    %1261 = vmatpush1.msra.mxu0 0.0
    %1262 = vmatprep.subr.mxu0 0.0
    %1263 = vmatpush1.msra.mxu0 0.0
    %1264 = vmatprep.subr.mxu0 0.0
    %1265 = vmatpush1.msra.mxu0 0.0
    %1266 = vmatprep.subr.mxu0 0.0
    %1267 = vmatpush1.msra.mxu0 0.0
    %1268 = vmatprep.subr.mxu0 0.0
    %1269 = vmatpush1.msra.mxu0 0.0
    %1270 = vmatprep.subr.mxu0 0.0
    %1271 = vmatpush1.msra.mxu0 0.0
    %1272 = vmatprep.subr.mxu0 0.0
    %1273 = vmatpush1.msra.mxu0 0.0
    %1274 = vmatprep.subr.mxu0 0.0
    %1275 = vmatpush1.msra.mxu0 0.0
    %1276 = vmatprep.subr.mxu0 0.0
    %1277 = vmatpush1.msra.mxu0 0.0
    %1278 = vmatprep.subr.mxu0 0.0
    %1279 = vmatpush1.msra.mxu0 0.0
    %1280 = vmatprep.mubr.f32.mxu0 0.0
    %1281 = vmatmul.mubr.f32.gmra.mrb[0].mxu0 %v1200
    %v1282 = vpop.f32.mrb[0].mxu0
    %v1283 = vadd.f32 0.0, %v1282
    %v1284 = vpop.f32.mrb[0].mxu0
    %v1285 = vadd.f32 0.0, %v1284
    %1286 = vdwg.mxu0
    %1287 = vmatprep.subr.mxu0 %v99
    %1288 = vmatpush1.msra.mxu0 %v98
    %1289 = vmatprep.subr.mxu0 %v103
    %1290 = vmatpush1.msra.mxu0 %v102
    %1291 = vmatprep.subr.mxu0 %v107
    %1292 = vmatpush1.msra.mxu0 %v106
    %1293 = vmatprep.subr.mxu0 %v111
    %1294 = vmatpush1.msra.mxu0 %v110
    %1295 = vmatprep.subr.mxu0 %v115
    %1296 = vmatpush1.msra.mxu0 %v114
    %1297 = vmatprep.subr.mxu0 %v119
    %1298 = vmatpush1.msra.mxu0 %v118
    %1299 = vmatprep.subr.mxu0 %v123
    %1300 = vmatpush1.msra.mxu0 %v122
    %1301 = vmatprep.subr.mxu0 %v127
    %1302 = vmatpush1.msra.mxu0 %v126
    %1303 = vmatprep.subr.mxu0 %v131
    %1304 = vmatpush1.msra.mxu0 %v130
    %1305 = vmatprep.subr.mxu0 %v135
    %1306 = vmatpush1.msra.mxu0 %v134
    %1307 = vmatprep.subr.mxu0 %v139
    %1308 = vmatpush1.msra.mxu0 %v138
    %1309 = vmatprep.subr.mxu0 %v143
    %1310 = vmatpush1.msra.mxu0 %v142
    %1311 = vmatprep.subr.mxu0 %v147
    %1312 = vmatpush1.msra.mxu0 %v146
    %1313 = vmatprep.subr.mxu0 %v151
    %1314 = vmatpush1.msra.mxu0 %v150
    %1315 = vmatprep.subr.mxu0 %v155
    %1316 = vmatpush1.msra.mxu0 %v154
    %1317 = vmatprep.subr.mxu0 %v159
    %1318 = vmatpush1.msra.mxu0 %v158
    %1319 = vmatprep.subr.mxu0 0.0
    %1320 = vmatpush1.msra.mxu0 0.0
    %1321 = vmatprep.subr.mxu0 0.0
    %1322 = vmatpush1.msra.mxu0 0.0
    %1323 = vmatprep.subr.mxu0 0.0
    %1324 = vmatpush1.msra.mxu0 0.0
    %1325 = vmatprep.subr.mxu0 0.0
    %1326 = vmatpush1.msra.mxu0 0.0
    %1327 = vmatprep.subr.mxu0 0.0
    %1328 = vmatpush1.msra.mxu0 0.0
    %1329 = vmatprep.subr.mxu0 0.0
    %1330 = vmatpush1.msra.mxu0 0.0
    %1331 = vmatprep.subr.mxu0 0.0
    %1332 = vmatpush1.msra.mxu0 0.0
    %1333 = vmatprep.subr.mxu0 0.0
    %1334 = vmatpush1.msra.mxu0 0.0
    %1335 = vmatprep.subr.mxu0 0.0
    %1336 = vmatpush1.msra.mxu0 0.0
    %1337 = vmatprep.subr.mxu0 0.0
    %1338 = vmatpush1.msra.mxu0 0.0
    %1339 = vmatprep.subr.mxu0 0.0
    %1340 = vmatpush1.msra.mxu0 0.0
    %1341 = vmatprep.subr.mxu0 0.0
    %1342 = vmatpush1.msra.mxu0 0.0
    %1343 = vmatprep.subr.mxu0 0.0
    %1344 = vmatpush1.msra.mxu0 0.0
    %1345 = vmatprep.subr.mxu0 0.0
    %1346 = vmatpush1.msra.mxu0 0.0
    %1347 = vmatprep.subr.mxu0 0.0
    %1348 = vmatpush1.msra.mxu0 0.0
    %1349 = vmatprep.subr.mxu0 0.0
    %1350 = vmatpush1.msra.mxu0 0.0
    %1351 = vmatprep.mubr.f32.mxu0 0.0
    %1352 = vmatmul.mubr.f32.gmra.mrb[0].mxu0 %v1200
    %v1353 = vpop.f32.mrb[0].mxu0
    %v1354 = vadd.f32 0.0, %v1353
    %v1355 = vpop.f32.mrb[0].mxu0
    %v1356 = vadd.f32 0.0, %v1355
    %1357 = vdwg.mxu0
    %v1358 = vadd.f32 %v1212, %v1283
    %v1359 = vadd.f32 %v1213, %v1285
    %v1360 = vadd.f32 %v1214, %v1354
    %v1361 = vadd.f32 %v1215, %v1356
    %v1362 = vtanh.pop %v1358
    %v1363 = vtanh.pop %v1359
    %v1364 = vtanh.pop %v1360
    %v1365 = vtanh.pop %v1361
    %v1366 = vmul.f32 %v1362, 0.5
    %v1367 = vmul.f32 %v1363, 0.5
    %v1368 = vmul.f32 %v1364, 0.5
    %v1369 = vadd.f32 %v1366, 0.5
    %v1370 = vadd.f32 %v1367, 0.5
    %v1371 = vadd.f32 %v1368, 0.5
    %v1372 = vmul.f32 %v1370, %v1198
    %v1373 = vmul.f32 %v1369, %v1365
    %v1374 = vadd.f32 %v1372, %v1373
    %v1375 = vtanh.pop %v1374
    %v1376 = vmul.f32 %v1371, %v1375
    %s1377 = scalar_lea.vmem %s0, 56
    %v1378 = vld [vmem:[%s1377] sm:$0xff]
    %1380 = vset.pattern.permute.xlu0 0
    %1381 = vperm.xlu0 %1380, %v1378
    %v1382 = vpop.permute.xlu0 %1381
    %v1384 = vmul.f32 %v1382, %v49
    %v1385 = vmul.f32 %v1382, %v53
    %v1386 = vmul.f32 %v1382, %v57
    %v1387 = vmul.f32 %v1382, %v61
    %v1388 = vadd.f32 %v1384, %v75
    %v1389 = vadd.f32 %v1385, %v79
    %v1390 = vadd.f32 %v1386, %v83
    %v1391 = vadd.f32 %v1387, %v87
    %1392 = vmatprep.subr.mxu0 %v97
    %1393 = vmatpush1.msra.mxu0 %v96
    %1394 = vmatprep.subr.mxu0 %v101
    %1395 = vmatpush1.msra.mxu0 %v100
    %1396 = vmatprep.subr.mxu0 %v105
    %1397 = vmatpush1.msra.mxu0 %v104
    %1398 = vmatprep.subr.mxu0 %v109
    %1399 = vmatpush1.msra.mxu0 %v108
    %1400 = vmatprep.subr.mxu0 %v113
    %1401 = vmatpush1.msra.mxu0 %v112
    %1402 = vmatprep.subr.mxu0 %v117
    %1403 = vmatpush1.msra.mxu0 %v116
    %1404 = vmatprep.subr.mxu0 %v121
    %1405 = vmatpush1.msra.mxu0 %v120
    %1406 = vmatprep.subr.mxu0 %v125
    %1407 = vmatpush1.msra.mxu0 %v124
    %1408 = vmatprep.subr.mxu0 %v129
    %1409 = vmatpush1.msra.mxu0 %v128
    %1410 = vmatprep.subr.mxu0 %v133
    %1411 = vmatpush1.msra.mxu0 %v132
    %1412 = vmatprep.subr.mxu0 %v137
    %1413 = vmatpush1.msra.mxu0 %v136
    %1414 = vmatprep.subr.mxu0 %v141
    %1415 = vmatpush1.msra.mxu0 %v140
    %1416 = vmatprep.subr.mxu0 %v145
    %1417 = vmatpush1.msra.mxu0 %v144
    %1418 = vmatprep.subr.mxu0 %v149
    %1419 = vmatpush1.msra.mxu0 %v148
    %1420 = vmatprep.subr.mxu0 %v153
    %1421 = vmatpush1.msra.mxu0 %v152
    %1422 = vmatprep.subr.mxu0 %v157
    %1423 = vmatpush1.msra.mxu0 %v156
    %1424 = vmatprep.subr.mxu0 0.0
    %1425 = vmatpush1.msra.mxu0 0.0
    %1426 = vmatprep.subr.mxu0 0.0
    %1427 = vmatpush1.msra.mxu0 0.0
    %1428 = vmatprep.subr.mxu0 0.0
    %1429 = vmatpush1.msra.mxu0 0.0
    %1430 = vmatprep.subr.mxu0 0.0
    %1431 = vmatpush1.msra.mxu0 0.0
    %1432 = vmatprep.subr.mxu0 0.0
    %1433 = vmatpush1.msra.mxu0 0.0
    %1434 = vmatprep.subr.mxu0 0.0
    %1435 = vmatpush1.msra.mxu0 0.0
    %1436 = vmatprep.subr.mxu0 0.0
    %1437 = vmatpush1.msra.mxu0 0.0
    %1438 = vmatprep.subr.mxu0 0.0
    %1439 = vmatpush1.msra.mxu0 0.0
    %1440 = vmatprep.subr.mxu0 0.0
    %1441 = vmatpush1.msra.mxu0 0.0
    %1442 = vmatprep.subr.mxu0 0.0
    %1443 = vmatpush1.msra.mxu0 0.0
    %1444 = vmatprep.subr.mxu0 0.0
    %1445 = vmatpush1.msra.mxu0 0.0
    %1446 = vmatprep.subr.mxu0 0.0
    %1447 = vmatpush1.msra.mxu0 0.0
    %1448 = vmatprep.subr.mxu0 0.0
    %1449 = vmatpush1.msra.mxu0 0.0
    %1450 = vmatprep.subr.mxu0 0.0
    %1451 = vmatpush1.msra.mxu0 0.0
    %1452 = vmatprep.subr.mxu0 0.0
    %1453 = vmatpush1.msra.mxu0 0.0
    %1454 = vmatprep.subr.mxu0 0.0
    %1455 = vmatpush1.msra.mxu0 0.0
    %1456 = vmatprep.mubr.f32.mxu0 0.0
    %1457 = vmatmul.mubr.f32.gmra.mrb[0].mxu0 %v1376
    %v1458 = vpop.f32.mrb[0].mxu0
    %v1459 = vadd.f32 0.0, %v1458
    %v1460 = vpop.f32.mrb[0].mxu0
    %v1461 = vadd.f32 0.0, %v1460
    %1462 = vdwg.mxu0
    %1463 = vmatprep.subr.mxu0 %v99
    %1464 = vmatpush1.msra.mxu0 %v98
    %1465 = vmatprep.subr.mxu0 %v103
    %1466 = vmatpush1.msra.mxu0 %v102
    %1467 = vmatprep.subr.mxu0 %v107
    %1468 = vmatpush1.msra.mxu0 %v106
    %1469 = vmatprep.subr.mxu0 %v111
    %1470 = vmatpush1.msra.mxu0 %v110
    %1471 = vmatprep.subr.mxu0 %v115
    %1472 = vmatpush1.msra.mxu0 %v114
    %1473 = vmatprep.subr.mxu0 %v119
    %1474 = vmatpush1.msra.mxu0 %v118
    %1475 = vmatprep.subr.mxu0 %v123
    %1476 = vmatpush1.msra.mxu0 %v122
    %1477 = vmatprep.subr.mxu0 %v127
    %1478 = vmatpush1.msra.mxu0 %v126
    %1479 = vmatprep.subr.mxu0 %v131
    %1480 = vmatpush1.msra.mxu0 %v130
    %1481 = vmatprep.subr.mxu0 %v135
    %1482 = vmatpush1.msra.mxu0 %v134
    %1483 = vmatprep.subr.mxu0 %v139
    %1484 = vmatpush1.msra.mxu0 %v138
    %1485 = vmatprep.subr.mxu0 %v143
    %1486 = vmatpush1.msra.mxu0 %v142
    %1487 = vmatprep.subr.mxu0 %v147
    %1488 = vmatpush1.msra.mxu0 %v146
    %1489 = vmatprep.subr.mxu0 %v151
    %1490 = vmatpush1.msra.mxu0 %v150
    %1491 = vmatprep.subr.mxu0 %v155
    %1492 = vmatpush1.msra.mxu0 %v154
    %1493 = vmatprep.subr.mxu0 %v159
    %1494 = vmatpush1.msra.mxu0 %v158
    %1495 = vmatprep.subr.mxu0 0.0
    %1496 = vmatpush1.msra.mxu0 0.0
    %1497 = vmatprep.subr.mxu0 0.0
    %1498 = vmatpush1.msra.mxu0 0.0
    %1499 = vmatprep.subr.mxu0 0.0
    %1500 = vmatpush1.msra.mxu0 0.0
    %1501 = vmatprep.subr.mxu0 0.0
    %1502 = vmatpush1.msra.mxu0 0.0
    %1503 = vmatprep.subr.mxu0 0.0
    %1504 = vmatpush1.msra.mxu0 0.0
    %1505 = vmatprep.subr.mxu0 0.0
    %1506 = vmatpush1.msra.mxu0 0.0
    %1507 = vmatprep.subr.mxu0 0.0
    %1508 = vmatpush1.msra.mxu0 0.0
    %1509 = vmatprep.subr.mxu0 0.0
    %1510 = vmatpush1.msra.mxu0 0.0
    %1511 = vmatprep.subr.mxu0 0.0
    %1512 = vmatpush1.msra.mxu0 0.0
    %1513 = vmatprep.subr.mxu0 0.0
    %1514 = vmatpush1.msra.mxu0 0.0
    %1515 = vmatprep.subr.mxu0 0.0
    %1516 = vmatpush1.msra.mxu0 0.0
    %1517 = vmatprep.subr.mxu0 0.0
    %1518 = vmatpush1.msra.mxu0 0.0
    %1519 = vmatprep.subr.mxu0 0.0
    %1520 = vmatpush1.msra.mxu0 0.0
    %1521 = vmatprep.subr.mxu0 0.0
    %1522 = vmatpush1.msra.mxu0 0.0
    %1523 = vmatprep.subr.mxu0 0.0
    %1524 = vmatpush1.msra.mxu0 0.0
    %1525 = vmatprep.subr.mxu0 0.0
    %1526 = vmatpush1.msra.mxu0 0.0
    %1527 = vmatprep.mubr.f32.mxu0 0.0
    %1528 = vmatmul.mubr.f32.gmra.mrb[0].mxu0 %v1376
    %v1529 = vpop.f32.mrb[0].mxu0
    %v1530 = vadd.f32 0.0, %v1529
    %v1531 = vpop.f32.mrb[0].mxu0
    %v1532 = vadd.f32 0.0, %v1531
    %1533 = vdwg.mxu0
    %v1534 = vadd.f32 %v1388, %v1459
    %v1535 = vadd.f32 %v1389, %v1461
    %v1536 = vadd.f32 %v1390, %v1530
    %v1537 = vadd.f32 %v1391, %v1532
    %v1538 = vtanh.pop %v1534
    %v1539 = vtanh.pop %v1535
    %v1540 = vtanh.pop %v1536
    %v1541 = vtanh.pop %v1537
    %v1542 = vmul.f32 %v1538, 0.5
    %v1543 = vmul.f32 %v1539, 0.5
    %v1544 = vmul.f32 %v1540, 0.5
    %v1545 = vadd.f32 %v1542, 0.5
    %v1546 = vadd.f32 %v1543, 0.5
    %v1547 = vadd.f32 %v1544, 0.5
    %v1548 = vmul.f32 %v1546, %v1374
    %v1549 = vmul.f32 %v1545, %v1541
    %v1550 = vadd.f32 %v1548, %v1549
    %v1551 = vtanh.pop %v1550
    %v1552 = vmul.f32 %v1547, %v1551
    %v1553 = vld [vmem:[%s4] sm:$0x1]
    %v1555 = vlaneseq
    %v1556 = vshrl.u32 %v1555, 7
    %v1557 = vsub.s32 0, %v1556
    %v1558 = vrot.slane %v1553, %v1557
    %v1560 = vmul.f32 %v1552, %v1558
    %1561 = vadd.xlane.f32.xlu0 %v1560
    %v1562 = vpop.xlane.xlu0 %1561
    %s1563 = sld [smem:[#allocation2]]
    %v1564 = vstv %s1563
    %v1565 = vadd.f32 %v1562, %v1564
    %vm1566 = vcmask 7168
    %1567 = vst.msk [vmem:[%s6] sm:$0xff] %vm1566, %v1565
    // Predicated region
    $region30: #{tpu_custom_call.1} parent=1 // pred_check
      _
    $region31: #{tpu_custom_call.1} parent=1 // pred_check_branch
      %1569 = sbr.rel (0) target = $region33
    $region32: #{tpu_custom_call.1} parent=1 // pred_region
      _
    $region33: #{tpu_custom_call.1} parent=1 // pred_fallthru
      _
    // Predicated region
    $region34: #{tpu_custom_call.1} parent=1 // pred_check
      _
    $region35: #{tpu_custom_call.1} parent=1 // pred_check_branch
      %1571 = sbr.rel (0) target = $region37
    $region36: #{tpu_custom_call.1} parent=1 // pred_region
      _
    $region37: #{tpu_custom_call.1} parent=1 // pred_fallthru
      _
    %1572 = vsyncpa [#allocation4], 1

</llo_original>
